<compile_context>
chip_gen: v7x
topology: tpu7x:2x2x1
jax: 0.10.0
libtpu: 0.0.40
codegen_flags: <defaults>
</compile_context>

<pallas_src>
import jax
import jax.numpy as jnp
from jax.experimental import pallas as pl
from jax.experimental.pallas import tpu as pltpu


# ----------------------------- kernel helpers -------------------------------

def _layernorm(x, eps=1e-6):
    # nn.LayerNorm(elementwise_affine=False): biased variance, eps inside sqrt.
    mean = jnp.mean(x, axis=-1, keepdims=True)
    var = jnp.mean((x - mean) ** 2, axis=-1, keepdims=True)
    return (x - mean) * jax.lax.rsqrt(var + eps)


def _gelu_exact(x):
    # PyTorch nn.GELU() default = exact (erf) formulation.
    return 0.5 * x * (1.0 + jax.lax.erf(x * (1.0 / jnp.sqrt(2.0).astype(x.dtype))))


def _default_vmem_limit():
    cap = 128 * 1024 * 1024
    try:
        cap = int(pltpu.get_tpu_info().vmem_capacity_bytes)
    except Exception:
        pass
    # ~75% of per-core VMEM, capped: 96 MiB on 128 MiB parts, 48 MiB on v7x (64 MiB).
    return max(32 * 1024 * 1024, min((cap * 3) // 4, 100 * 1024 * 1024))


# --------------------------- kernel 1: attention -----------------------------

def attention_kernel(q_ref, k_ref, v_ref, pw_ref, pb_ref, x_ref, cond_ref,
                     o_ref, m_sc, l_sc, oacc_sc, proj_sc):
    hg = pl.program_id(2)          # head-group index
    ki = pl.program_id(3)          # kv-tile index
    nhg = pl.num_programs(2)
    nk = pl.num_programs(3)

    # ---- per (batch, q-tile) init: zero the projected-attention accumulator ----
    @pl.when(jnp.logical_and(hg == 0, ki == 0))
    def _():
        proj_sc[...] = jnp.zeros_like(proj_sc)

    # ---- per head-group init: reset online-softmax state ----
    @pl.when(ki == 0)
    def _():
        m_sc[...] = jnp.full_like(m_sc, -jnp.inf)
        l_sc[...] = jnp.zeros_like(l_sc)
        oacc_sc[...] = jnp.zeros_like(oacc_sc)

    q = q_ref[0, 0]                # (G, TQ, hd) bf16, softmax scale pre-folded
    k = k_ref[0, 0]                # (G, TK, hd) bf16
    v = v_ref[0, 0]                # (G, TK, hd) bf16

    # one online-softmax step (heads batched on the leading dim)
    s = jax.lax.dot_general(q, k, (((2,), (2,)), ((0,), (0,))),
                            preferred_element_type=jnp.float32)      # (G, TQ, TK)
    m_prev = m_sc[...]
    m_new = jnp.maximum(m_prev, jnp.max(s, axis=-1, keepdims=True))
    corr = jnp.exp(m_prev - m_new)
    p = jnp.exp(s - m_new)
    l_sc[...] = corr * l_sc[...] + jnp.sum(p, axis=-1, keepdims=True)
    pv = jax.lax.dot_general(p.astype(jnp.bfloat16), v,
                             (((2,), (1,)), ((0,), (0,))),
                             preferred_element_type=jnp.float32)     # (G, TQ, hd)
    oacc_sc[...] = corr * oacc_sc[...] + pv
    m_sc[...] = m_new

    # ---- per head-group finalize: normalize, fold group into output projection ----
    @pl.when(ki == nk - 1)
    def _():
        inv_l = pl.reciprocal(l_sc[...], approx=False)
        attn = (oacc_sc[...] * inv_l).astype(jnp.bfloat16)           # (G, TQ, hd)
        ph = jax.lax.dot_general(attn, pw_ref[0],                    # pw: (G, hd, D)
                                 (((2,), (1,)), ((0,), (0,))),
                                 preferred_element_type=jnp.float32)  # (G, TQ, D)
        proj_sc[...] += jnp.sum(ph, axis=0)

    # ---- epilogue (last group, last KV tile): residual with alpha1 ----
    @pl.when(jnp.logical_and(hg == nhg - 1, ki == nk - 1))
    def _():
        alpha1 = cond_ref[0, 4:5, :]                                 # (1, D)
        attn_out = proj_sc[...] + pb_ref[...]
        x_tile = x_ref[0].astype(jnp.float32)
        o_ref[0] = (x_tile + alpha1 * attn_out).astype(o_ref.dtype)


# ------------------------------ kernel 2: MLP ---------------------------------

def mlp_kernel(x1_ref, cond_ref, w1_ref, b1_ref, w2_ref, b2_ref,
               o_ref, xn2_sc, ff_sc):
    c = pl.program_id(2)           # mlp_dim chunk index
    nc = pl.num_programs(2)

    # ---- per (batch, seq-tile) init: adaLN2 once, zero ff accumulator ----
    @pl.when(c == 0)
    def _():
        x1 = x1_ref[0].astype(jnp.float32)
        gamma2 = cond_ref[0, 2:3, :]
        beta2 = cond_ref[0, 3:4, :]
        xn2 = _layernorm(x1) * (1.0 + gamma2) + beta2
        xn2_sc[...] = xn2.astype(jnp.bfloat16)
        ff_sc[...] = jnp.zeros_like(ff_sc)

    # ---- one mlp_dim chunk: Linear -> GELU -> partial second Linear ----
    h = jnp.dot(xn2_sc[...], w1_ref[...], preferred_element_type=jnp.float32)
    h = _gelu_exact(h + b1_ref[...])          # dropout rate=0 -> identity
    ff_sc[...] += jnp.dot(h.astype(jnp.bfloat16), w2_ref[...],
                          preferred_element_type=jnp.float32)

    # ---- epilogue: residual with alpha2 ----
    @pl.when(c == nc - 1)
    def _():
        alpha2 = cond_ref[0, 5:6, :]
        ff = ff_sc[...] + b2_ref[...]
        x1 = x1_ref[0].astype(jnp.float32)
        o_ref[0] = (x1 + alpha2 * ff).astype(o_ref.dtype)


# ------------------------------- wrapper --------------------------------------

def dit_block(x, cond, params, *, dim, num_heads, q_block=None, kv_block=None,
              seq_block=None, mlp_chunk=None, heads_per_group=None):
    B, N, D = x.shape
    assert D == dim
    H = num_heads
    assert D % H == 0
    hd = D // H

    f32, bf16 = jnp.float32, jnp.bfloat16

    # --- head grouping: smallest divisor of H giving >=128 lanes per group ---
    if heads_per_group is None:
        heads_per_group = H
        for g in range(1, H + 1):
            if H % g == 0 and g * hd >= 128:
                heads_per_group = g
                break
    G = heads_per_group
    assert H % G == 0
    HG = H // G

    if q_block is None:
        q_block = min(N, 512)
    if kv_block is None:
        kv_block = min(N, 512)
    if seq_block is None:
        seq_block = q_block
    mlp_dim = params["w1"].shape[1]
    if mlp_chunk is None:
        mlp_chunk = min(mlp_dim, 512)
    assert N % q_block == 0 and N % kv_block == 0 and N % seq_block == 0
    assert mlp_dim % mlp_chunk == 0
    nq, nk = N // q_block, N // kv_block
    nt, nc = N // seq_block, mlp_dim // mlp_chunk

    # ---------------- conditioning path hoisted (tiny matmuls) ----------------
    x32 = x.astype(f32)
    cond32 = cond.astype(f32)
    cond_out = cond32 @ params["cw"].astype(f32) + params["cb"].astype(f32)
    gamma1 = cond_out[:, 0 * D:1 * D][:, None, :]
    beta1 = cond_out[:, 1 * D:2 * D][:, None, :]
    gamma2 = cond_out[:, 2 * D:3 * D][:, None, :]
    beta2 = cond_out[:, 3 * D:4 * D][:, None, :]
    alpha1 = (cond32 @ params["a1w"].astype(f32) + params["a1b"].astype(f32))[:, None, :]
    alpha2 = (cond32 @ params["a2w"].astype(f32) + params["a2b"].astype(f32))[:, None, :]
    # packed, sublane-aligned conditioning rows: [g1, b1, g2, b2, a1, a2, 0, 0]
    cond_pack = jnp.concatenate(
        [gamma1, beta1, gamma2, beta2, alpha1, alpha2, jnp.zeros((B, 2, D), f32)],
        axis=1)                                                      # (B, 8, D)

    # -------- adaLN1 + QKV projection hoisted; Q/K/V streamed as bf16 ---------
    xn1 = _layernorm(x32) * (1.0 + gamma1) + beta1
    qkv = xn1 @ params["qkvw"].astype(f32) + params["qkvb"].astype(f32)  # (B, N, 3D)

    def split_heads(t):                       # (B, N, D) -> (B, HG, G, N, hd)
        return t.reshape(B, N, HG, G, hd).transpose(0, 2, 3, 1, 4)

    scale = 1.0 / (hd ** 0.5)
    q = split_heads(qkv[..., 0 * D:1 * D] * scale).astype(bf16)
    k = split_heads(qkv[..., 1 * D:2 * D]).astype(bf16)
    v = split_heads(qkv[..., 2 * D:3 * D]).astype(bf16)

    pw_g = params["pw"].reshape(HG, G, hd, D).astype(bf16)
    pb = params["pb"].astype(f32)
    w1 = params["w1"].astype(bf16)
    b1 = params["b1"].astype(f32)
    w2 = params["w2"].astype(bf16)
    b2 = params["b2"].astype(f32)

    vmem_limit = _default_vmem_limit()

    # ----------------------------- kernel 1 call ------------------------------
    q_spec = pl.BlockSpec((1, 1, G, q_block, hd), lambda b, qi, hg, ki: (b, hg, 0, qi, 0))
    kv_spec = pl.BlockSpec((1, 1, G, kv_block, hd), lambda b, qi, hg, ki: (b, hg, 0, ki, 0))
    attn_in_specs = [
        q_spec,
        kv_spec,
        kv_spec,
        pl.BlockSpec((1, G, hd, D), lambda b, qi, hg, ki: (hg, 0, 0, 0)),   # pw (group)
        pl.BlockSpec((1, D), lambda b, qi, hg, ki: (0, 0)),                 # pb
        pl.BlockSpec((1, q_block, D), lambda b, qi, hg, ki: (b, qi, 0)),    # x (residual)
        pl.BlockSpec((1, 8, D), lambda b, qi, hg, ki: (b, 0, 0)),           # packed cond
    ]
    attn_out_spec = pl.BlockSpec((1, q_block, D), lambda b, qi, hg, ki: (b, qi, 0))
    attn_scratch = [
        pltpu.VMEM((G, q_block, 1), f32),     # online-softmax running max
        pltpu.VMEM((G, q_block, 1), f32),     # online-softmax denominator
        pltpu.VMEM((G, q_block, hd), f32),    # per-group attention accumulator
        pltpu.VMEM((q_block, D), f32),        # projected-attention accumulator
    ]
    x1 = pl.pallas_call(
        attention_kernel,
        out_shape=jax.ShapeDtypeStruct((B, N, D), x.dtype),
        grid=(B, nq, HG, nk),
        in_specs=attn_in_specs,
        out_specs=attn_out_spec,
        scratch_shapes=attn_scratch,
        compiler_params=pltpu.CompilerParams(
            dimension_semantics=("parallel", "parallel", "arbitrary", "arbitrary"),
            vmem_limit_bytes=vmem_limit),
    )(q, k, v, pw_g, pb, x32, cond_pack)

    # ----------------------------- kernel 2 call ------------------------------
    mlp_in_specs = [
        pl.BlockSpec((1, seq_block, D), lambda b, t, c: (b, t, 0)),   # x1
        pl.BlockSpec((1, 8, D), lambda b, t, c: (b, 0, 0)),           # packed cond
        pl.BlockSpec((D, mlp_chunk), lambda b, t, c: (0, c)),         # w1 chunk
        pl.BlockSpec((1, mlp_chunk), lambda b, t, c: (0, c)),         # b1 chunk
        pl.BlockSpec((mlp_chunk, D), lambda b, t, c: (c, 0)),         # w2 chunk
        pl.BlockSpec((1, D), lambda b, t, c: (0, 0)),                 # b2
    ]
    out = pl.pallas_call(
        mlp_kernel,
        out_shape=jax.ShapeDtypeStruct((B, N, D), x.dtype),
        grid=(B, nt, nc),
        in_specs=mlp_in_specs,
        out_specs=pl.BlockSpec((1, seq_block, D), lambda b, t, c: (b, t, 0)),
        scratch_shapes=[pltpu.VMEM((seq_block, D), bf16),   # adaLN2(x1) cache
                        pltpu.VMEM((seq_block, D), f32)],   # ff accumulator
        compiler_params=pltpu.CompilerParams(
            dimension_semantics=("parallel", "parallel", "arbitrary"),
            vmem_limit_bytes=vmem_limit),
    )(x1, cond_pack, w1, b1, w2, b2)
    return out


# --------------------------- pure-JAX reference -------------------------------

def dit_block_ref(x, cond, p, *, dim, num_heads):
    B, N, D = x.shape
    hd = D // num_heads

    def ln(t):
        m = t.mean(-1, keepdims=True)
        v = ((t - m) ** 2).mean(-1, keepdims=True)
        return (t - m) / jnp.sqrt(v + 1e-6)

    cond_out = cond @ p["cw"] + p["cb"]
    gamma1, beta1 = cond_out[:, :D], cond_out[:, D:2 * D]
    gamma2, beta2 = cond_out[:, 2 * D:3 * D], cond_out[:, 3 * D:]

    xn = ln(x) * (1.0 + gamma1[:, None, :]) + beta1[:, None, :]
    qkv = xn @ p["qkvw"] + p["qkvb"]
    q, k, v = qkv[..., :D], qkv[..., D:2 * D], qkv[..., 2 * D:]
    q = q.reshape(B, N, num_heads, hd).transpose(0, 2, 1, 3)
    k = k.reshape(B, N, num_heads, hd).transpose(0, 2, 1, 3)
    v = v.reshape(B, N, num_heads, hd).transpose(0, 2, 1, 3)
    s = jnp.einsum("bhqd,bhkd->bhqk", q, k) / (hd ** 0.5)
    a = jax.nn.softmax(s, axis=-1)
    o = jnp.einsum("bhqk,bhkd->bhqd", a, v).transpose(0, 2, 1, 3).reshape(B, N, D)
    attn = o @ p["pw"] + p["pb"]

    alpha1 = cond @ p["a1w"] + p["a1b"]
    x = x + alpha1[:, None, :] * attn

    xn2 = ln(x) * (1.0 + gamma2[:, None, :]) + beta2[:, None, :]
    h = jax.nn.gelu(xn2 @ p["w1"] + p["b1"], approximate=False)
    ff = h @ p["w2"] + p["b2"]
    alpha2 = cond @ p["a2w"] + p["a2b"]
    return x + alpha2[:, None, :] * ff


# ---------------------------------- main --------------------------------------

if __name__ == "__main__":
    # small toy shapes; exercises 2x2 q/kv tiles and 2 mlp chunks
    B, N, D, H, MLP = 2, 16, 32, 4, 256

    key = jax.random.PRNGKey(0)
    keys = jax.random.split(key, 20)

    def w(k, shape, scale=0.05):
        return jax.random.normal(k, shape, dtype=jnp.float32) * scale

    params = {
        "cw":   w(keys[0], (D, 4 * D)),
        "cb":   w(keys[1], (1, 4 * D)),
        "a1w":  w(keys[2], (D, D)),
        "a1b":  w(keys[3], (1, D)),
        "a2w":  w(keys[4], (D, D)),
        "a2b":  w(keys[5], (1, D)),
        "qkvw": w(keys[6], (D, 3 * D)),
        "qkvb": w(keys[7], (1, 3 * D)),
        "pw":   w(keys[8], (D, D)),
        "pb":   w(keys[9], (1, D)),
        "w1":   w(keys[10], (D, MLP)),
        "b1":   w(keys[11], (1, MLP)),
        "w2":   w(keys[12], (MLP, D)),
        "b2":   w(keys[13], (1, D)),
    }

    x = jax.random.normal(keys[14], (B, N, D), dtype=jnp.float32)
    cond = jax.random.normal(keys[15], (B, D), dtype=jnp.float32)

    out = dit_block(x, cond, params, dim=D, num_heads=H,
                    q_block=8, kv_block=8, seq_block=8, mlp_chunk=128)
    out = jax.block_until_ready(out)

    ref = dit_block_ref(x, cond, params, dim=D, num_heads=H)
    # bf16 Q/K/V/P and MLP operands -> compare with loosened tolerance.
    if not jnp.allclose(out, ref, rtol=2e-2, atol=2e-2):
        err = jnp.max(jnp.abs(out - ref))
        raise AssertionError(f"Pallas kernel output mismatch vs JAX reference (max abs err {err})")

    print("KERNEL_OK")
</pallas_src>

<mosaic_0001>
module attributes {stable_mosaic.version = 11 : i64} {
  func.func @attention_kernel(%arg0: i32, %arg1: i32, %arg2: i32, %arg3: i32, %arg4: memref<1x1x4x8x8xbf16, #tpu.memory_space<vmem>>, %arg5: memref<1x1x4x8x8xbf16, #tpu.memory_space<vmem>>, %arg6: memref<1x1x4x8x8xbf16, #tpu.memory_space<vmem>>, %arg7: memref<1x4x8x32xbf16, #tpu.memory_space<vmem>>, %arg8: memref<1x32xf32, #tpu.memory_space<vmem>>, %arg9: memref<1x8x32xf32, #tpu.memory_space<vmem>>, %arg10: memref<1x8x32xf32, #tpu.memory_space<vmem>>, %arg11: memref<1x8x32xf32, #tpu.memory_space<vmem>>, %arg12: memref<4x8x1xf32, #tpu.memory_space<vmem>>, %arg13: memref<4x8x1xf32, #tpu.memory_space<vmem>>, %arg14: memref<4x8x8xf32, #tpu.memory_space<vmem>>, %arg15: memref<8x32xf32, #tpu.memory_space<vmem>>) attributes {dimension_semantics = [#tpu.dimension_semantics<parallel>, #tpu.dimension_semantics<parallel>, #tpu.dimension_semantics<arbitrary>, #tpu.dimension_semantics<arbitrary>], iteration_bounds = array<i64: 2, 2, 1, 2>, scalar_prefetch = 0 : i64, scratch_operands = 4 : i64, tpu.core_type = #tpu.core_type<tc>, window_params = [{transform_indices = @transform_0, window_bounds = array<i64: 1, 1, 4, 8, 8>}, {transform_indices = @transform_1, window_bounds = array<i64: 1, 1, 4, 8, 8>}, {transform_indices = @transform_2, window_bounds = array<i64: 1, 1, 4, 8, 8>}, {transform_indices = @transform_3, window_bounds = array<i64: 1, 4, 8, 32>}, {pipeline_mode = #tpu.pipeline_mode<synchronous>, transform_indices = @transform_4, window_bounds = array<i64: 1, 32>}, {transform_indices = @transform_5, window_bounds = array<i64: 1, 8, 32>}, {transform_indices = @transform_6, window_bounds = array<i64: 1, 8, 32>}, {transform_indices = @transform_7, window_bounds = array<i64: 1, 8, 32>}]} {
    %c0_i32 = arith.constant 0 : i32
    %0 = arith.cmpi eq, %arg2, %c0_i32 : i32
    %c0_i32_0 = arith.constant 0 : i32
    %1 = arith.cmpi eq, %arg3, %c0_i32_0 : i32
    %2 = arith.andi %0, %1 : i1
    %3 = arith.extui %2 : i1 to i32
    %c0_i32_1 = arith.constant 0 : i32
    %4 = arith.cmpi ne, %3, %c0_i32_1 : i32
    scf.if %4 {
      %cst_43 = arith.constant 0.000000e+00 : f32
      %46 = vector.broadcast %cst_43 : f32 to vector<8x32xf32>
      %c0_44 = arith.constant 0 : index
      %c0_45 = arith.constant 0 : index
      %47 = vector.load %arg15[%c0_44, %c0_45] : memref<8x32xf32, #tpu.memory_space<vmem>>, vector<8x32xf32>
      tpu.vector_store %arg15[%c0_44, %c0_45], %46 {strides = array<i32>} : memref<8x32xf32, #tpu.memory_space<vmem>>, vector<8x32xf32>,
    } else {
    }
    %c0_i32_2 = arith.constant 0 : i32
    %5 = arith.cmpi eq, %arg3, %c0_i32_2 : i32
    %6 = arith.extui %5 : i1 to i32
    %c0_i32_3 = arith.constant 0 : i32
    %7 = arith.cmpi ne, %6, %c0_i32_3 : i32
    scf.if %7 {
      %cst_43 = arith.constant 0xFF800000 : f32
      %46 = vector.broadcast %cst_43 : f32 to vector<4x8x1xf32>
      %c0_44 = arith.constant 0 : index
      %c0_45 = arith.constant 0 : index
      %c0_46 = arith.constant 0 : index
      %47 = vector.load %arg12[%c0_44, %c0_45, %c0_46] : memref<4x8x1xf32, #tpu.memory_space<vmem>>, vector<4x8x1xf32>
      tpu.vector_store %arg12[%c0_44, %c0_45, %c0_46], %46 {strides = array<i32>} : memref<4x8x1xf32, #tpu.memory_space<vmem>>, vector<4x8x1xf32>,
      %cst_47 = arith.constant 0.000000e+00 : f32
      %48 = vector.broadcast %cst_47 : f32 to vector<4x8x1xf32>
      %c0_48 = arith.constant 0 : index
      %c0_49 = arith.constant 0 : index
      %c0_50 = arith.constant 0 : index
      %49 = vector.load %arg13[%c0_48, %c0_49, %c0_50] : memref<4x8x1xf32, #tpu.memory_space<vmem>>, vector<4x8x1xf32>
      tpu.vector_store %arg13[%c0_48, %c0_49, %c0_50], %48 {strides = array<i32>} : memref<4x8x1xf32, #tpu.memory_space<vmem>>, vector<4x8x1xf32>,
      %cst_51 = arith.constant 0.000000e+00 : f32
      %50 = vector.broadcast %cst_51 : f32 to vector<4x8x8xf32>
      %c0_52 = arith.constant 0 : index
      %c0_53 = arith.constant 0 : index
      %c0_54 = arith.constant 0 : index
      %51 = vector.load %arg14[%c0_52, %c0_53, %c0_54] : memref<4x8x8xf32, #tpu.memory_space<vmem>>, vector<4x8x8xf32>
      tpu.vector_store %arg14[%c0_52, %c0_53, %c0_54], %50 {strides = array<i32>} : memref<4x8x8xf32, #tpu.memory_space<vmem>>, vector<4x8x8xf32>,
    } else {
    }
    %c0 = arith.constant 0 : index
    %c0_4 = arith.constant 0 : index
    %c0_5 = arith.constant 0 : index
    %c0_6 = arith.constant 0 : index
    %c0_7 = arith.constant 0 : index
    %8 = vector.load %arg4[%c0, %c0_4, %c0_5, %c0_6, %c0_7] : memref<1x1x4x8x8xbf16, #tpu.memory_space<vmem>>, vector<1x1x4x8x8xbf16>
    %9 = vector.shape_cast %8 : vector<1x1x4x8x8xbf16> to vector<4x8x8xbf16>
    %c0_8 = arith.constant 0 : index
    %c0_9 = arith.constant 0 : index
    %c0_10 = arith.constant 0 : index
    %c0_11 = arith.constant 0 : index
    %c0_12 = arith.constant 0 : index
    %10 = vector.load %arg5[%c0_8, %c0_9, %c0_10, %c0_11, %c0_12] : memref<1x1x4x8x8xbf16, #tpu.memory_space<vmem>>, vector<1x1x4x8x8xbf16>
    %11 = vector.shape_cast %10 : vector<1x1x4x8x8xbf16> to vector<4x8x8xbf16>
    %c0_13 = arith.constant 0 : index
    %c0_14 = arith.constant 0 : index
    %c0_15 = arith.constant 0 : index
    %c0_16 = arith.constant 0 : index
    %c0_17 = arith.constant 0 : index
    %12 = vector.load %arg6[%c0_13, %c0_14, %c0_15, %c0_16, %c0_17] : memref<1x1x4x8x8xbf16, #tpu.memory_space<vmem>>, vector<1x1x4x8x8xbf16>
    %13 = vector.shape_cast %12 : vector<1x1x4x8x8xbf16> to vector<4x8x8xbf16>
    %cst = arith.constant dense<0.000000e+00> : vector<4x8x8xf32>
    %14 = tpu.matmul %9, %11, %cst {dimension_numbers = #tpu.dot_dimension_numbers<[2], [2], [1], [1], [0, 0, 0, 1, 1, 1], [0], [0]>} : vector<4x8x8xbf16>, vector<4x8x8xbf16>, vector<4x8x8xf32> -> vector<4x8x8xf32>
    %c0_18 = arith.constant 0 : index
    %c0_19 = arith.constant 0 : index
    %c0_20 = arith.constant 0 : index
    %15 = vector.load %arg12[%c0_18, %c0_19, %c0_20] : memref<4x8x1xf32, #tpu.memory_space<vmem>>, vector<4x8x1xf32>
    %cst_21 = arith.constant dense<0xFF800000> : vector<4x8xf32>
    %16 = vector.multi_reduction <maximumf>, %14, %cst_21 [2] : vector<4x8x8xf32> to vector<4x8xf32>
    %17 = vector.shape_cast %16 : vector<4x8xf32> to vector<4x8x1xf32>
    %18 = arith.maximumf %15, %17 : vector<4x8x1xf32>
    %19 = arith.subf %15, %18 : vector<4x8x1xf32>
    %20 = math.exp %19 : vector<4x8x1xf32>
    %21 = vector.broadcast %18 : vector<4x8x1xf32> to vector<4x8x8xf32>
    %22 = arith.subf %14, %21 : vector<4x8x8xf32>
    %23 = math.exp %22 : vector<4x8x8xf32>
    %c0_22 = arith.constant 0 : index
    %c0_23 = arith.constant 0 : index
    %c0_24 = arith.constant 0 : index
    %24 = vector.load %arg13[%c0_22, %c0_23, %c0_24] : memref<4x8x1xf32, #tpu.memory_space<vmem>>, vector<4x8x1xf32>
    %25 = arith.mulf %20, %24 : vector<4x8x1xf32>
    %cst_25 = arith.constant dense<0.000000e+00> : vector<4x8xf32>
    %26 = vector.multi_reduction <add>, %23, %cst_25 [2] : vector<4x8x8xf32> to vector<4x8xf32>
    %27 = vector.shape_cast %26 : vector<4x8xf32> to vector<4x8x1xf32>
    %28 = arith.addf %25, %27 : vector<4x8x1xf32>
    %c0_26 = arith.constant 0 : index
    %c0_27 = arith.constant 0 : index
    %c0_28 = arith.constant 0 : index
    %29 = vector.load %arg13[%c0_26, %c0_27, %c0_28] : memref<4x8x1xf32, #tpu.memory_space<vmem>>, vector<4x8x1xf32>
    tpu.vector_store %arg13[%c0_26, %c0_27, %c0_28], %28 {strides = array<i32>} : memref<4x8x1xf32, #tpu.memory_space<vmem>>, vector<4x8x1xf32>,
    %30 = arith.truncf %23 : vector<4x8x8xf32> to vector<4x8x8xbf16>
    %cst_29 = arith.constant dense<0.000000e+00> : vector<4x8x8xf32>
    %31 = tpu.matmul %30, %13, %cst_29 {dimension_numbers = #tpu.dot_dimension_numbers<[2], [1], [1], [2], [0, 0, 0, 1, 1, 2], [0], [0]>} : vector<4x8x8xbf16>, vector<4x8x8xbf16>, vector<4x8x8xf32> -> vector<4x8x8xf32>
    %c0_30 = arith.constant 0 : index
    %c0_31 = arith.constant 0 : index
    %c0_32 = arith.constant 0 : index
    %32 = vector.load %arg14[%c0_30, %c0_31, %c0_32] : memref<4x8x8xf32, #tpu.memory_space<vmem>>, vector<4x8x8xf32>
    %33 = vector.broadcast %20 : vector<4x8x1xf32> to vector<4x8x8xf32>
    %34 = arith.mulf %33, %32 : vector<4x8x8xf32>
    %35 = arith.addf %34, %31 : vector<4x8x8xf32>
    %c0_33 = arith.constant 0 : index
    %c0_34 = arith.constant 0 : index
    %c0_35 = arith.constant 0 : index
    %36 = vector.load %arg14[%c0_33, %c0_34, %c0_35] : memref<4x8x8xf32, #tpu.memory_space<vmem>>, vector<4x8x8xf32>
    tpu.vector_store %arg14[%c0_33, %c0_34, %c0_35], %35 {strides = array<i32>} : memref<4x8x8xf32, #tpu.memory_space<vmem>>, vector<4x8x8xf32>,
    %c0_36 = arith.constant 0 : index
    %c0_37 = arith.constant 0 : index
    %c0_38 = arith.constant 0 : index
    %37 = vector.load %arg12[%c0_36, %c0_37, %c0_38] : memref<4x8x1xf32, #tpu.memory_space<vmem>>, vector<4x8x1xf32>
    tpu.vector_store %arg12[%c0_36, %c0_37, %c0_38], %18 {strides = array<i32>} : memref<4x8x1xf32, #tpu.memory_space<vmem>>, vector<4x8x1xf32>,
    %c1_i32 = arith.constant 1 : i32
    %38 = arith.cmpi eq, %arg3, %c1_i32 : i32
    %39 = arith.extui %38 : i1 to i32
    %c0_i32_39 = arith.constant 0 : i32
    %40 = arith.cmpi ne, %39, %c0_i32_39 : i32
    scf.if %40 {
      %c0_43 = arith.constant 0 : index
      %c0_44 = arith.constant 0 : index
      %c0_45 = arith.constant 0 : index
      %46 = vector.load %arg13[%c0_43, %c0_44, %c0_45] : memref<4x8x1xf32, #tpu.memory_space<vmem>>, vector<4x8x1xf32>
      %47 = tpu.reciprocal %46 : vector<4x8x1xf32> -> vector<4x8x1xf32>
      %c0_46 = arith.constant 0 : index
      %c0_47 = arith.constant 0 : index
      %c0_48 = arith.constant 0 : index
      %48 = vector.load %arg14[%c0_46, %c0_47, %c0_48] : memref<4x8x8xf32, #tpu.memory_space<vmem>>, vector<4x8x8xf32>
      %49 = vector.broadcast %47 : vector<4x8x1xf32> to vector<4x8x8xf32>
      %50 = arith.mulf %48, %49 : vector<4x8x8xf32>
      %51 = arith.truncf %50 : vector<4x8x8xf32> to vector<4x8x8xbf16>
      %c0_49 = arith.constant 0 : index
      %c0_50 = arith.constant 0 : index
      %c0_51 = arith.constant 0 : index
      %c0_52 = arith.constant 0 : index
      %52 = vector.load %arg7[%c0_49, %c0_50, %c0_51, %c0_52] : memref<1x4x8x32xbf16, #tpu.memory_space<vmem>>, vector<1x4x8x32xbf16>
      %53 = vector.shape_cast %52 : vector<1x4x8x32xbf16> to vector<4x8x32xbf16>
      %cst_53 = arith.constant dense<0.000000e+00> : vector<4x8x32xf32>
      %54 = tpu.matmul %51, %53, %cst_53 {dimension_numbers = #tpu.dot_dimension_numbers<[2], [1], [1], [2], [0, 0, 0, 1, 1, 2], [0], [0]>} : vector<4x8x8xbf16>, vector<4x8x32xbf16>, vector<4x8x32xf32> -> vector<4x8x32xf32>
      %c0_54 = arith.constant 0 : index
      %c0_55 = arith.constant 0 : index
      %55 = vector.load %arg15[%c0_54, %c0_55] : memref<8x32xf32, #tpu.memory_space<vmem>>, vector<8x32xf32>
      %cst_56 = arith.constant dense<0.000000e+00> : vector<8x32xf32>
      %56 = vector.multi_reduction <add>, %54, %cst_56 [0] : vector<4x8x32xf32> to vector<8x32xf32>
      %57 = arith.addf %55, %56 : vector<8x32xf32>
      %c0_57 = arith.constant 0 : index
      %c0_58 = arith.constant 0 : index
      %58 = vector.load %arg15[%c0_57, %c0_58] : memref<8x32xf32, #tpu.memory_space<vmem>>, vector<8x32xf32>
      tpu.vector_store %arg15[%c0_57, %c0_58], %57 {strides = array<i32>} : memref<8x32xf32, #tpu.memory_space<vmem>>, vector<8x32xf32>,
    } else {
    }
    %c0_i32_40 = arith.constant 0 : i32
    %41 = arith.cmpi eq, %arg2, %c0_i32_40 : i32
    %c1_i32_41 = arith.constant 1 : i32
    %42 = arith.cmpi eq, %arg3, %c1_i32_41 : i32
    %43 = arith.andi %41, %42 : i1
    %44 = arith.extui %43 : i1 to i32
    %c0_i32_42 = arith.constant 0 : i32
    %45 = arith.cmpi ne, %44, %c0_i32_42 : i32
    scf.if %45 {
      %c0_43 = arith.constant 0 : index
      %c4 = arith.constant 4 : index
      %c0_44 = arith.constant 0 : index
      %46 = vector.load %arg10[%c0_43, %c4, %c0_44] : memref<1x8x32xf32, #tpu.memory_space<vmem>>, vector<1x1x32xf32>
      %47 = vector.shape_cast %46 : vector<1x1x32xf32> to vector<1x32xf32>
      %c0_45 = arith.constant 0 : index
      %c0_46 = arith.constant 0 : index
      %48 = vector.load %arg15[%c0_45, %c0_46] : memref<8x32xf32, #tpu.memory_space<vmem>>, vector<8x32xf32>
      %c0_47 = arith.constant 0 : index
      %c0_48 = arith.constant 0 : index
      %49 = vector.load %arg8[%c0_47, %c0_48] : memref<1x32xf32, #tpu.memory_space<vmem>>, vector<1x32xf32>
      %50 = vector.broadcast %49 : vector<1x32xf32> to vector<8x32xf32>
      %51 = arith.addf %48, %50 : vector<8x32xf32>
      %c0_49 = arith.constant 0 : index
      %c0_50 = arith.constant 0 : index
      %c0_51 = arith.constant 0 : index
      %52 = vector.load %arg9[%c0_49, %c0_50, %c0_51] : memref<1x8x32xf32, #tpu.memory_space<vmem>>, vector<1x8x32xf32>
      %53 = vector.shape_cast %52 : vector<1x8x32xf32> to vector<8x32xf32>
      %54 = vector.broadcast %47 : vector<1x32xf32> to vector<8x32xf32>
      %55 = arith.mulf %54, %51 : vector<8x32xf32>
      %56 = arith.addf %53, %55 : vector<8x32xf32>
      %c0_52 = arith.constant 0 : index
      %c0_53 = arith.constant 0 : index
      %c0_54 = arith.constant 0 : index
      %57 = vector.load %arg11[%c0_52, %c0_53, %c0_54] : memref<1x8x32xf32, #tpu.memory_space<vmem>>, vector<1x8x32xf32>
      %58 = vector.shape_cast %57 : vector<1x8x32xf32> to vector<8x32xf32>
      %59 = vector.shape_cast %56 : vector<8x32xf32> to vector<1x8x32xf32>
      tpu.vector_store %arg11[%c0_52, %c0_53, %c0_54], %59 {strides = array<i32>} : memref<1x8x32xf32, #tpu.memory_space<vmem>>, vector<1x8x32xf32>,
    } else {
    }
    return
  }
  func.func @transform_0(%arg0: i32, %arg1: i32, %arg2: i32, %arg3: i32) -> (i32, i32, i32, i32, i32) {
    %c0_i32 = arith.constant 0 : i32
    %c0_i32_0 = arith.constant 0 : i32
    %c0_i32_1 = arith.constant 0 : i32
    return %arg0, %arg2, %c0_i32, %arg1, %c0_i32_0 : i32, i32, i32, i32, i32
  }
  func.func @transform_1(%arg0: i32, %arg1: i32, %arg2: i32, %arg3: i32) -> (i32, i32, i32, i32, i32) {
    %c0_i32 = arith.constant 0 : i32
    %c0_i32_0 = arith.constant 0 : i32
    %c0_i32_1 = arith.constant 0 : i32
    return %arg0, %arg2, %c0_i32, %arg3, %c0_i32_0 : i32, i32, i32, i32, i32
  }
  func.func @transform_2(%arg0: i32, %arg1: i32, %arg2: i32, %arg3: i32) -> (i32, i32, i32, i32, i32) {
    %c0_i32 = arith.constant 0 : i32
    %c0_i32_0 = arith.constant 0 : i32
    %c0_i32_1 = arith.constant 0 : i32
    return %arg0, %arg2, %c0_i32, %arg3, %c0_i32_0 : i32, i32, i32, i32, i32
  }
  func.func @transform_3(%arg0: i32, %arg1: i32, %arg2: i32, %arg3: i32) -> (i32, i32, i32, i32) {
    %c0_i32 = arith.constant 0 : i32
    %c0_i32_0 = arith.constant 0 : i32
    %c0_i32_1 = arith.constant 0 : i32
    %c0_i32_2 = arith.constant 0 : i32
    return %arg2, %c0_i32, %c0_i32_0, %c0_i32_1 : i32, i32, i32, i32
  }
  func.func @transform_4(%arg0: i32, %arg1: i32, %arg2: i32, %arg3: i32) -> (i32, i32) {
    %c0_i32 = arith.constant 0 : i32
    %c0_i32_0 = arith.constant 0 : i32
    %c0_i32_1 = arith.constant 0 : i32
    return %c0_i32, %c0_i32_0 : i32, i32
  }
  func.func @transform_5(%arg0: i32, %arg1: i32, %arg2: i32, %arg3: i32) -> (i32, i32, i32) {
    %c0_i32 = arith.constant 0 : i32
    %c0_i32_0 = arith.constant 0 : i32
    return %arg0, %arg1, %c0_i32 : i32, i32, i32
  }
  func.func @transform_6(%arg0: i32, %arg1: i32, %arg2: i32, %arg3: i32) -> (i32, i32, i32) {
    %c0_i32 = arith.constant 0 : i32
    %c0_i32_0 = arith.constant 0 : i32
    %c0_i32_1 = arith.constant 0 : i32
    return %arg0, %c0_i32, %c0_i32_0 : i32, i32, i32
  }
  func.func @transform_7(%arg0: i32, %arg1: i32, %arg2: i32, %arg3: i32) -> (i32, i32, i32) {
    %c0_i32 = arith.constant 0 : i32
    %c0_i32_0 = arith.constant 0 : i32
    return %arg0, %arg1, %c0_i32 : i32, i32, i32
  }
}

</mosaic_0001>

<llo_original>
// kernel: tpu_custom_call.1
$region0: #{tpu_custom_call.1}
  #allocation0 [shape = 'u32[]', space=smem, size = 0x4, offset = 0x4, fixed_abs, tag = 'smem constant byte address 0x4 - core index']
  #allocation1 [shape = 'u32[144,128]{1,0:T(1,128)}', space=vmem, size = 0x12000, scoped, tag = 'internal scratch']
  #allocation2 [shape = 'f32[4,8,1]{2,1,0:T(8,128)}', space=vmem, size = 0x4000, scoped, tag = 'scratch operand']
  #allocation3 [shape = 'f32[4,8,1]{2,1,0:T(8,128)}', space=vmem, size = 0x4000, scoped, tag = 'scratch operand']
  #allocation4 [shape = 'f32[4,8,8]{2,1,0:T(8,128)}', space=vmem, size = 0x4000, scoped, tag = 'scratch operand']
  #allocation5 [shape = 'f32[8,32]{1,0:T(8,128)}', space=vmem, size = 0x1000, scoped, tag = 'scratch operand']
  %s0 = inlined_call_operand.hbm [shape: bf16[2,1,4,16,8], index: 0, kind: input, shape index: {}]
  %s1 = inlined_call_operand.hbm [shape: bf16[2,1,4,16,8], index: 1, kind: input, shape index: {}]
  %s2 = inlined_call_operand.hbm [shape: bf16[2,1,4,16,8], index: 2, kind: input, shape index: {}]
  %s3 = inlined_call_operand.hbm [shape: bf16[1,4,8,32], index: 3, kind: input, shape index: {}]
  %s4 = inlined_call_operand.hbm [shape: f32[1,32], index: 4, kind: input, shape index: {}]
  %s5 = inlined_call_operand.hbm [shape: f32[2,16,32], index: 5, kind: input, shape index: {}]
  %s6 = inlined_call_operand.hbm [shape: f32[2,8,32], index: 6, kind: input, shape index: {}]
  %s7 = inlined_call_operand.hbm [shape: f32[2,16,32], index: 7, kind: output, shape index: {}]
  %s8 = sld [smem:[#allocation0]]
  $region105: #{tpu_custom_call.1} parent=0
    _
  %s10 = ssub.s32 1, %s8
  %s11 = scalar_select 0, %s10, %s8
  $region1: #{tpu_custom_call.1} parent=0
    #allocation6 [shape = 'u8[16384]{0}', space=vmem, size = 0x4000, scoped, tag = 'input window, operand 0']
    #allocation7 [shape = 's32[2]{0}', space=sflag, size = 0x8, scoped, tag = 'scoped memory for tpu_custom_call.1']
    #allocation8 [shape = 's32[2]{0}', space=sflag, size = 0x8, scoped, tag = 'scoped memory for tpu_custom_call.1']
    #allocation9 [shape = 'u8[16384]{0}', space=vmem, size = 0x4000, scoped, tag = 'input window, operand 1']
    #allocation10 [shape = 's32[2]{0}', space=sflag, size = 0x8, scoped, tag = 'scoped memory for tpu_custom_call.1']
    #allocation11 [shape = 'u8[16384]{0}', space=vmem, size = 0x4000, scoped, tag = 'input window, operand 2']
    #allocation12 [shape = 'u8[8192]{0}', space=vmem, size = 0x2000, scoped, tag = 'input window, operand 3, single buffered']
    #allocation13 [shape = 's32[1]{0}', space=sflag, size = 0x4, scoped, tag = 'scoped memory for tpu_custom_call.1']
    #allocation14 [shape = 'u8[512]{0}', space=vmem, size = 0x400, scoped, tag = 'input window, operand 4, single buffered']
    #allocation15 [shape = 'u8[8192]{0}', space=vmem, size = 0x2000, scoped, tag = 'input window, operand 5']
    #allocation16 [shape = 's32[2]{0}', space=sflag, size = 0x8, scoped, tag = 'scoped memory for tpu_custom_call.1']
    #allocation17 [shape = 'u8[8192]{0}', space=vmem, size = 0x2000, scoped, tag = 'input window, operand 6']
    #allocation18 [shape = 'u8[8192]{0}', space=vmem, size = 0x2000, scoped, tag = 'output window, operand 0']
    %12 = vsyncpa [#allocation7], 0
    %s13 = scalar_lea.sflag [#allocation7], 1
    %14 = vsyncpa %s13, 0
    %15 = vsyncpa [#allocation10], 0
    %s16 = scalar_lea.sflag [#allocation10], 1
    %17 = vsyncpa %s16, 0
    %18 = vsyncpa [#allocation13], 0
    %19 = vsyncpa [#allocation16], 0
    %s20 = scalar_lea.sflag [#allocation16], 1
    %21 = vsyncpa %s20, 0
    %22 = vsyncpa [#allocation8], 0
    %s23 = scalar_lea.sflag [#allocation8], 1
    %24 = vsyncpa %s23, 0
    loop: start=0, step=1, limit=10
    $region2: #{tpu_custom_call.1} parent=1 // loop_pre_header
      _
    $region3: #{tpu_custom_call.1} parent=1 // loop_header
      %s26 = sphi 0, %s30
      %p27 = scmp.ge.s32.totalorder %s26, 10
      %s33 = sphi 0, %s59
      %s34 = sphi 0, %s55
      %s35 = sphi 0, %s51
      %s36 = sphi 0, %s47
      %s37 = sphi 0, %s33
      %s38 = sphi 0, %s34
      %s39 = sphi 0, %s35
      %s40 = sphi 0, %s36
      %s41 = sphi 0, %s37
      %s42 = sphi 0, %s38
      %s43 = sphi 0, %s39
      %s44 = sphi 0, %s40
      %s66 = sphi 0, %s68
      %s69 = sphi 0, %s66
      %s70 = sphi 0, %s69
      %s86 = sphi 0, %s70
      %s96 = sphi 0, %s98
      %s99 = sphi 0, %s96
      %s100 = sphi 0, %s99
      %s116 = sphi 0, %s100
      %s126 = sphi 0, %s128
      %s129 = sphi 0, %s126
      %s130 = sphi 0, %s129
      %s146 = sphi 0, %s130
      %s152 = sphi 0, %s154
      %s155 = sphi 0, %s152
      %s156 = sphi 0, %s155
      %s172 = sphi 0, %s156
      %s176 = sphi 0, %s176
      %s178 = sphi 0, %s176
      %s179 = sphi 0, %s178
      %s193 = sphi 0, %s179
      %s201 = sphi 0, %s203
      %s204 = sphi 0, %s201
      %s205 = sphi 0, %s204
      %s221 = sphi 0, %s205
      %s227 = sphi 0, %s229
      %s230 = sphi 0, %s227
      %s231 = sphi 0, %s230
      %s247 = sphi 0, %s231
      %s255 = sphi 0, %s257
      %s258 = sphi 0, %s255
      %s259 = sphi 0, %s258
      %s275 = sphi 0, %s259
    $region4: #{tpu_custom_call.1} parent=1 // loop_header_branch
      %29 = sbr.rel (%p27) target = $region8
    $region5: #{tpu_custom_call.1} parent=1 // loop_body
      %s31 = ssub.s32 %s26, 1
      %s32 = ssub.s32 %s26, 2
      %s45 = sadd.s32 1, %s36
      %p46 = scmp.ge.s32.totalorder %s45, 2
      %s47 = scalar_select %p46, 0, %s45
      %s48 = sadd.s32 1, %s35
      %s49 = scalar_select %p46, %s48, %s35
      %p50 = scmp.ge.s32.totalorder %s49, 1
      %s51 = scalar_select %p50, 0, %s49
      %s52 = sadd.s32 1, %s34
      %s53 = scalar_select %p50, %s52, %s34
      %p54 = scmp.ge.s32.totalorder %s53, 2
      %s55 = scalar_select %p54, 0, %s53
      %s56 = sadd.s32 1, %s33
      %s57 = scalar_select %p54, %s56, %s33
      %p58 = scmp.ge.s32.totalorder %s57, 2
      %s59 = scalar_select %p58, 0, %s57
      %s60 = ssub.s32 %s33, %s59
      %s61 = ssub.s32 %s35, %s51
      %s62 = sor.u32 %s60, %s61
      %s63 = ssub.s32 %s34, %s55
      %s64 = sor.u32 %s62, %s63
      %p65 = scmp.eq.s32.totalorder %s64, 0
      %s67 = sadd.s32 %s66, 1
      %s68 = scalar_select %p65, %s66, %s67
      %p71 = pneg %p65
      %p72 = scmp.eq.s32.totalorder %s26, 7
      %p73 = por %p71, %p72
      %p74 = scmp.ne.s32.totalorder %s66, %s69
      %p75 = scmp.eq.s32.totalorder %s26, 0
      %p76 = por %p74, %p75
      %p77 = scmp.ne.s32.totalorder %s66, %s69
      %p78 = scmp.eq.s32.totalorder %s31, 7
      %p79 = por %p77, %p78
      %p80 = scmp.ne.s32.totalorder %s69, %s70
      %p81 = scmp.eq.s32.totalorder %s31, 0
      %p82 = por %p80, %p81
      %p83 = scmp.ne.s32.totalorder %s69, %s70
      %p84 = scmp.eq.s32.totalorder %s32, 7
      %p85 = por %p83, %p84
      %p87 = scmp.ne.s32.totalorder %s70, %s86
      %p88 = scmp.eq.s32.totalorder %s32, 0
      %p89 = por %p87, %p88
      %s90 = ssub.s32 %s33, %s59
      %s91 = ssub.s32 %s35, %s51
      %s92 = sor.u32 %s90, %s91
      %s93 = ssub.s32 %s36, %s47
      %s94 = sor.u32 %s92, %s93
      %p95 = scmp.eq.s32.totalorder %s94, 0
      %s97 = sadd.s32 %s96, 1
      %s98 = scalar_select %p95, %s96, %s97
      %p101 = pneg %p95
      %p102 = scmp.eq.s32.totalorder %s26, 7
      %p103 = por %p101, %p102
      %p104 = scmp.ne.s32.totalorder %s96, %s99
      %p105 = scmp.eq.s32.totalorder %s26, 0
      %p106 = por %p104, %p105
      %p107 = scmp.ne.s32.totalorder %s96, %s99
      %p108 = scmp.eq.s32.totalorder %s31, 7
      %p109 = por %p107, %p108
      %p110 = scmp.ne.s32.totalorder %s99, %s100
      %p111 = scmp.eq.s32.totalorder %s31, 0
      %p112 = por %p110, %p111
      %p113 = scmp.ne.s32.totalorder %s99, %s100
      %p114 = scmp.eq.s32.totalorder %s32, 7
      %p115 = por %p113, %p114
      %p117 = scmp.ne.s32.totalorder %s100, %s116
      %p118 = scmp.eq.s32.totalorder %s32, 0
      %p119 = por %p117, %p118
      %s120 = ssub.s32 %s33, %s59
      %s121 = ssub.s32 %s35, %s51
      %s122 = sor.u32 %s120, %s121
      %s123 = ssub.s32 %s36, %s47
      %s124 = sor.u32 %s122, %s123
      %p125 = scmp.eq.s32.totalorder %s124, 0
      %s127 = sadd.s32 %s126, 1
      %s128 = scalar_select %p125, %s126, %s127
      %p131 = pneg %p125
      %p132 = scmp.eq.s32.totalorder %s26, 7
      %p133 = por %p131, %p132
      %p134 = scmp.ne.s32.totalorder %s126, %s129
      %p135 = scmp.eq.s32.totalorder %s26, 0
      %p136 = por %p134, %p135
      %p137 = scmp.ne.s32.totalorder %s126, %s129
      %p138 = scmp.eq.s32.totalorder %s31, 7
      %p139 = por %p137, %p138
      %p140 = scmp.ne.s32.totalorder %s129, %s130
      %p141 = scmp.eq.s32.totalorder %s31, 0
      %p142 = por %p140, %p141
      %p143 = scmp.ne.s32.totalorder %s129, %s130
      %p144 = scmp.eq.s32.totalorder %s32, 7
      %p145 = por %p143, %p144
      %p147 = scmp.ne.s32.totalorder %s130, %s146
      %p148 = scmp.eq.s32.totalorder %s32, 0
      %p149 = por %p147, %p148
      %s150 = ssub.s32 %s35, %s51
      %p151 = scmp.eq.s32.totalorder %s150, 0
      %s153 = sadd.s32 %s152, 1
      %s154 = scalar_select %p151, %s152, %s153
      %p157 = pneg %p151
      %p158 = scmp.eq.s32.totalorder %s26, 7
      %p159 = por %p157, %p158
      %p160 = scmp.ne.s32.totalorder %s152, %s155
      %p161 = scmp.eq.s32.totalorder %s26, 0
      %p162 = por %p160, %p161
      %p163 = scmp.ne.s32.totalorder %s152, %s155
      %p164 = scmp.eq.s32.totalorder %s31, 7
      %p165 = por %p163, %p164
      %p166 = scmp.ne.s32.totalorder %s155, %s156
      %p167 = scmp.eq.s32.totalorder %s31, 0
      %p168 = por %p166, %p167
      %p169 = scmp.ne.s32.totalorder %s155, %s156
      %p170 = scmp.eq.s32.totalorder %s32, 7
      %p171 = por %p169, %p170
      %p173 = scmp.ne.s32.totalorder %s156, %s172
      %p174 = scmp.eq.s32.totalorder %s32, 0
      %p175 = por %p173, %p174
      %s177 = sadd.s32 %s176, 1
      %p180 = scmp.eq.s32.totalorder %s26, 7
      %p181 = scmp.ne.s32.totalorder %s176, %s178
      %p182 = scmp.eq.s32.totalorder %s26, 0
      %p183 = por %p181, %p182
      %p184 = scmp.ne.s32.totalorder %s176, %s178
      %p185 = scmp.eq.s32.totalorder %s31, 7
      %p186 = por %p184, %p185
      %p187 = scmp.ne.s32.totalorder %s178, %s179
      %p188 = scmp.eq.s32.totalorder %s31, 0
      %p189 = por %p187, %p188
      %p190 = scmp.ne.s32.totalorder %s178, %s179
      %p191 = scmp.eq.s32.totalorder %s32, 7
      %p192 = por %p190, %p191
      %p194 = scmp.ne.s32.totalorder %s179, %s193
      %p195 = scmp.eq.s32.totalorder %s32, 0
      %p196 = por %p194, %p195
      %s197 = ssub.s32 %s33, %s59
      %s198 = ssub.s32 %s34, %s55
      %s199 = sor.u32 %s197, %s198
      %p200 = scmp.eq.s32.totalorder %s199, 0
      %s202 = sadd.s32 %s201, 1
      %s203 = scalar_select %p200, %s201, %s202
      %p206 = pneg %p200
      %p207 = scmp.eq.s32.totalorder %s26, 7
      %p208 = por %p206, %p207
      %p209 = scmp.ne.s32.totalorder %s201, %s204
      %p210 = scmp.eq.s32.totalorder %s26, 0
      %p211 = por %p209, %p210
      %p212 = scmp.ne.s32.totalorder %s201, %s204
      %p213 = scmp.eq.s32.totalorder %s31, 7
      %p214 = por %p212, %p213
      %p215 = scmp.ne.s32.totalorder %s204, %s205
      %p216 = scmp.eq.s32.totalorder %s31, 0
      %p217 = por %p215, %p216
      %p218 = scmp.ne.s32.totalorder %s204, %s205
      %p219 = scmp.eq.s32.totalorder %s32, 7
      %p220 = por %p218, %p219
      %p222 = scmp.ne.s32.totalorder %s205, %s221
      %p223 = scmp.eq.s32.totalorder %s32, 0
      %p224 = por %p222, %p223
      %s225 = ssub.s32 %s33, %s59
      %p226 = scmp.eq.s32.totalorder %s225, 0
      %s228 = sadd.s32 %s227, 1
      %s229 = scalar_select %p226, %s227, %s228
      %p232 = pneg %p226
      %p233 = scmp.eq.s32.totalorder %s26, 7
      %p234 = por %p232, %p233
      %p235 = scmp.ne.s32.totalorder %s227, %s230
      %p236 = scmp.eq.s32.totalorder %s26, 0
      %p237 = por %p235, %p236
      %p238 = scmp.ne.s32.totalorder %s227, %s230
      %p239 = scmp.eq.s32.totalorder %s31, 7
      %p240 = por %p238, %p239
      %p241 = scmp.ne.s32.totalorder %s230, %s231
      %p242 = scmp.eq.s32.totalorder %s31, 0
      %p243 = por %p241, %p242
      %p244 = scmp.ne.s32.totalorder %s230, %s231
      %p245 = scmp.eq.s32.totalorder %s32, 7
      %p246 = por %p244, %p245
      %p248 = scmp.ne.s32.totalorder %s231, %s247
      %p249 = scmp.eq.s32.totalorder %s32, 0
      %p250 = por %p248, %p249
      %s251 = ssub.s32 %s33, %s59
      %s252 = ssub.s32 %s34, %s55
      %s253 = sor.u32 %s251, %s252
      %p254 = scmp.eq.s32.totalorder %s253, 0
      %s256 = sadd.s32 %s255, 1
      %s257 = scalar_select %p254, %s255, %s256
      %p260 = pneg %p254
      %p261 = scmp.eq.s32.totalorder %s26, 7
      %p262 = por %p260, %p261
      %p263 = scmp.ne.s32.totalorder %s255, %s258
      %p264 = scmp.eq.s32.totalorder %s26, 0
      %p265 = por %p263, %p264
      %p266 = scmp.ne.s32.totalorder %s255, %s258
      %p267 = scmp.eq.s32.totalorder %s31, 7
      %p268 = por %p266, %p267
      %p269 = scmp.ne.s32.totalorder %s258, %s259
      %p270 = scmp.eq.s32.totalorder %s31, 0
      %p271 = por %p269, %p270
      %p272 = scmp.ne.s32.totalorder %s258, %s259
      %p273 = scmp.eq.s32.totalorder %s32, 7
      %p274 = por %p272, %p273
      %p276 = scmp.ne.s32.totalorder %s259, %s275
      %p277 = scmp.eq.s32.totalorder %s32, 0
      %p278 = por %p276, %p277
      %p279 = scmp.le.s32.totalorder 1, %s26
      %p280 = scmp.lt.s32.totalorder %s26, 9
      %p281 = pnand %p279, %p280
      %p282 = pneg %p281
      // Predicated region
      $region9: #{tpu_custom_call.1} parent=5 // pred_check
        _
      $region10: #{tpu_custom_call.1} parent=5 // pred_check_branch
        %284 = sbr.rel (%p281) target = $region12
      $region11: #{tpu_custom_call.1} parent=5 // pred_region
        %s285 = ssub.s32 %s26, 1
        // Predicated region
        $region13: #{tpu_custom_call.1} parent=11 // pred_check
          %p286 = pneg %p168
        $region14: #{tpu_custom_call.1} parent=11 // pred_check_branch
          %288 = sbr.rel (%p286) target = $region16
        $region15: #{tpu_custom_call.1} parent=11 // pred_region
          %s290 = ssub.s32 256, 256
          %291 = vsyncadd [#allocation13], %s290
          %s292 = smul.addr %s39, 4
          %s293 = smul.addr %s292, 64
          %s294 = scalar_lea.hbm %s3, %s293
          %s295 = sshll.u32 [#allocation12], 4
          %s296 = int_to_ptr.vmem [resolvable:$true] %s295
          %301 = dma.hbm_to_vmem [thread:$0]  %s294, 256, %s296, [#allocation13], 64, 64, 4
        $region16: #{tpu_custom_call.1} parent=11 // pred_fallthru
          _
        // Predicated region
        $region17: #{tpu_custom_call.1} parent=11 // pred_check
          %p302 = pneg %p189
        $region18: #{tpu_custom_call.1} parent=11 // pred_check_branch
          %304 = sbr.rel (%p302) target = $region20
        $region19: #{tpu_custom_call.1} parent=11 // pred_region
          %s306 = ssub.s32 16, 16
          %307 = vsyncadd [#allocation13], %s306
          %s309 = sshll.u32 [#allocation14], 4
          %s310 = int_to_ptr.vmem [resolvable:$true] %s309
          %312 = dma.hbm_to_vmem [thread:$0]  %s4, 16, %s310, [#allocation13]
        $region20: #{tpu_custom_call.1} parent=11 // pred_fallthru
          _
      $region12: #{tpu_custom_call.1} parent=5 // pred_fallthru
        _
      %p313 = scmp.lt.s32.totalorder %s26, 8
      // Predicated region
      $region21: #{tpu_custom_call.1} parent=5 // pred_check
        %p314 = pneg %p313
      $region22: #{tpu_custom_call.1} parent=5 // pred_check_branch
        %316 = sbr.rel (%p314) target = $region24
      $region23: #{tpu_custom_call.1} parent=5 // pred_region
        // Predicated region
        $region25: #{tpu_custom_call.1} parent=23 // pred_check
          %p317 = pneg %p76
        $region26: #{tpu_custom_call.1} parent=23 // pred_check_branch
          %319 = sbr.rel (%p317) target = $region28
        $region27: #{tpu_custom_call.1} parent=23 // pred_region
          %s320 = sand.u32 %s66, 1
          %s321 = scalar_lea.sflag [#allocation7], %s320
          %s322 = sand.u32 %s66, 1
          %s323 = smul.addr %s322, 16
          %s324 = scalar_lea.vmem [#allocation6], %s323
          %s326 = ssub.s32 256, 256
          %327 = vsyncadd %s321, %s326
          %s328 = smul.addr %s35, 8
          %s329 = sadd.s32 %s34, %s328
          %s330 = smul.addr %s33, 8
          %s331 = sadd.s32 %s329, %s330
          %s332 = smul.addr %s331, 64
          %s333 = scalar_lea.hbm %s0, %s332
          %s334 = sshll.u32 %s324, 4
          %s335 = int_to_ptr.vmem [resolvable:$true] %s334
          %340 = dma.hbm_to_vmem [thread:$0]  %s333, 256, %s335, %s321, 128, 64, 4
        $region28: #{tpu_custom_call.1} parent=23 // pred_fallthru
          _
        // Predicated region
        $region29: #{tpu_custom_call.1} parent=23 // pred_check
          %p341 = pneg %p106
        $region30: #{tpu_custom_call.1} parent=23 // pred_check_branch
          %343 = sbr.rel (%p341) target = $region32
        $region31: #{tpu_custom_call.1} parent=23 // pred_region
          %s344 = sand.u32 %s26, 1
          %s345 = scalar_lea.sflag [#allocation10], %s344
          %s346 = sand.u32 %s96, 1
          %s347 = smul.addr %s346, 16
          %s348 = scalar_lea.vmem [#allocation9], %s347
          %s350 = ssub.s32 256, 256
          %351 = vsyncadd %s345, %s350
          %s352 = smul.addr %s35, 8
          %s353 = sadd.s32 %s36, %s352
          %s354 = smul.addr %s33, 8
          %s355 = sadd.s32 %s353, %s354
          %s356 = smul.addr %s355, 64
          %s357 = scalar_lea.hbm %s1, %s356
          %s358 = sshll.u32 %s348, 4
          %s359 = int_to_ptr.vmem [resolvable:$true] %s358
          %364 = dma.hbm_to_vmem [thread:$0]  %s357, 256, %s359, %s345, 128, 64, 4
        $region32: #{tpu_custom_call.1} parent=23 // pred_fallthru
          _
        // Predicated region
        $region33: #{tpu_custom_call.1} parent=23 // pred_check
          %p365 = pneg %p136
        $region34: #{tpu_custom_call.1} parent=23 // pred_check_branch
          %367 = sbr.rel (%p365) target = $region36
        $region35: #{tpu_custom_call.1} parent=23 // pred_region
          %s368 = sand.u32 %s26, 1
          %s369 = scalar_lea.sflag [#allocation10], %s368
          %s370 = sand.u32 %s126, 1
          %s371 = smul.addr %s370, 16
          %s372 = scalar_lea.vmem [#allocation11], %s371
          %s374 = ssub.s32 256, 256
          %375 = vsyncadd %s369, %s374
          %s376 = smul.addr %s35, 8
          %s377 = sadd.s32 %s36, %s376
          %s378 = smul.addr %s33, 8
          %s379 = sadd.s32 %s377, %s378
          %s380 = smul.addr %s379, 64
          %s381 = scalar_lea.hbm %s2, %s380
          %s382 = sshll.u32 %s372, 4
          %s383 = int_to_ptr.vmem [resolvable:$true] %s382
          %388 = dma.hbm_to_vmem [thread:$0]  %s381, 256, %s383, %s369, 128, 64, 4
        $region36: #{tpu_custom_call.1} parent=23 // pred_fallthru
          _
        // Predicated region
        $region37: #{tpu_custom_call.1} parent=23 // pred_check
          %p389 = pneg %p211
        $region38: #{tpu_custom_call.1} parent=23 // pred_check_branch
          %391 = sbr.rel (%p389) target = $region40
        $region39: #{tpu_custom_call.1} parent=23 // pred_region
          %s392 = sand.u32 %s26, 1
          %s393 = scalar_lea.sflag [#allocation16], %s392
          %s394 = sand.u32 %s201, 1
          %s395 = smul.addr %s394, 8
          %s396 = scalar_lea.vmem [#allocation15], %s395
          %s398 = ssub.s32 128, 128
          %399 = vsyncadd %s393, %s398
          %s400 = smul.addr %s33, 2
          %s401 = sadd.s32 %s34, %s400
          %s402 = smul.addr %s401, 128
          %s403 = scalar_lea.hbm %s5, %s402
          %s405 = sshll.u32 %s396, 4
          %s406 = int_to_ptr.vmem [resolvable:$true] %s405
          %408 = dma.hbm_to_vmem [thread:$0]  %s403, 128, %s406, %s393
        $region40: #{tpu_custom_call.1} parent=23 // pred_fallthru
          _
        // Predicated region
        $region41: #{tpu_custom_call.1} parent=23 // pred_check
          %p409 = pneg %p237
        $region42: #{tpu_custom_call.1} parent=23 // pred_check_branch
          %411 = sbr.rel (%p409) target = $region44
        $region43: #{tpu_custom_call.1} parent=23 // pred_region
          %s412 = sand.u32 %s26, 1
          %s413 = scalar_lea.sflag [#allocation16], %s412
          %s414 = sand.u32 %s227, 1
          %s415 = smul.addr %s414, 8
          %s416 = scalar_lea.vmem [#allocation17], %s415
          %s418 = ssub.s32 128, 128
          %419 = vsyncadd %s413, %s418
          %s420 = smul.addr %s33, 128
          %s421 = scalar_lea.hbm %s6, %s420
          %s423 = sshll.u32 %s416, 4
          %s424 = int_to_ptr.vmem [resolvable:$true] %s423
          %426 = dma.hbm_to_vmem [thread:$0]  %s421, 128, %s424, %s413
        $region44: #{tpu_custom_call.1} parent=23 // pred_fallthru
          _
      $region24: #{tpu_custom_call.1} parent=5 // pred_fallthru
        _
      %p427 = scmp.le.s32.totalorder 1, %s26
      %p428 = scmp.lt.s32.totalorder %s26, 9
      %p429 = pnand %p427, %p428
      %p430 = pneg %p429
      // Predicated region
      $region45: #{tpu_custom_call.1} parent=5 // pred_check
        _
      $region46: #{tpu_custom_call.1} parent=5 // pred_check_branch
        %432 = sbr.rel (%p429) target = $region48
      $region47: #{tpu_custom_call.1} parent=5 // pred_region
        %s433 = ssub.s32 %s26, 1
        %s434 = sand.u32 %s69, 1
        %s435 = scalar_lea.sflag [#allocation7], %s434
        %s436 = sand.u32 %s69, 1
        %s437 = smul.addr %s436, 16
        %s438 = scalar_lea.vmem [#allocation6], %s437
        // Predicated region
        $region49: #{tpu_custom_call.1} parent=47 // pred_check
          %p439 = pneg %p82
        $region50: #{tpu_custom_call.1} parent=47 // pred_check_branch
          %441 = sbr.rel (%p439) target = $region52
        $region51: #{tpu_custom_call.1} parent=47 // pred_region
          %442 = dma.done %s435, 256
        $region52: #{tpu_custom_call.1} parent=47 // pred_fallthru
          _
        %s443 = sand.u32 %s31, 1
        %s444 = scalar_lea.sflag [#allocation10], %s443
        %s445 = sand.u32 %s99, 1
        %s446 = smul.addr %s445, 16
        %s447 = scalar_lea.vmem [#allocation9], %s446
        // Predicated region
        $region53: #{tpu_custom_call.1} parent=47 // pred_check
          %p448 = pneg %p112
        $region54: #{tpu_custom_call.1} parent=47 // pred_check_branch
          %450 = sbr.rel (%p448) target = $region56
        $region55: #{tpu_custom_call.1} parent=47 // pred_region
          %451 = dma.done %s444, 256
        $region56: #{tpu_custom_call.1} parent=47 // pred_fallthru
          _
        %s452 = sand.u32 %s31, 1
        %s453 = scalar_lea.sflag [#allocation10], %s452
        %s454 = sand.u32 %s129, 1
        %s455 = smul.addr %s454, 16
        %s456 = scalar_lea.vmem [#allocation11], %s455
        // Predicated region
        $region57: #{tpu_custom_call.1} parent=47 // pred_check
          %p457 = pneg %p142
        $region58: #{tpu_custom_call.1} parent=47 // pred_check_branch
          %459 = sbr.rel (%p457) target = $region60
        $region59: #{tpu_custom_call.1} parent=47 // pred_region
          %460 = dma.done %s453, 256
        $region60: #{tpu_custom_call.1} parent=47 // pred_fallthru
          _
        // Predicated region
        $region61: #{tpu_custom_call.1} parent=47 // pred_check
          %p461 = pneg %p168
        $region62: #{tpu_custom_call.1} parent=47 // pred_check_branch
          %463 = sbr.rel (%p461) target = $region64
        $region63: #{tpu_custom_call.1} parent=47 // pred_region
          %464 = dma.done [#allocation13], 256
        $region64: #{tpu_custom_call.1} parent=47 // pred_fallthru
          _
        // Predicated region
        $region65: #{tpu_custom_call.1} parent=47 // pred_check
          %p465 = pneg %p189
        $region66: #{tpu_custom_call.1} parent=47 // pred_check_branch
          %467 = sbr.rel (%p465) target = $region68
        $region67: #{tpu_custom_call.1} parent=47 // pred_region
          %468 = dma.done [#allocation13], 16
        $region68: #{tpu_custom_call.1} parent=47 // pred_fallthru
          _
        %s469 = sand.u32 %s31, 1
        %s470 = scalar_lea.sflag [#allocation16], %s469
        %s471 = sand.u32 %s204, 1
        %s472 = smul.addr %s471, 8
        %s473 = scalar_lea.vmem [#allocation15], %s472
        // Predicated region
        $region69: #{tpu_custom_call.1} parent=47 // pred_check
          %p474 = pneg %p217
        $region70: #{tpu_custom_call.1} parent=47 // pred_check_branch
          %476 = sbr.rel (%p474) target = $region72
        $region71: #{tpu_custom_call.1} parent=47 // pred_region
          %477 = dma.done %s470, 128
        $region72: #{tpu_custom_call.1} parent=47 // pred_fallthru
          _
        %s478 = sand.u32 %s31, 1
        %s479 = scalar_lea.sflag [#allocation16], %s478
        %s480 = sand.u32 %s230, 1
        %s481 = smul.addr %s480, 8
        %s482 = scalar_lea.vmem [#allocation17], %s481
        // Predicated region
        $region73: #{tpu_custom_call.1} parent=47 // pred_check
          %p483 = pneg %p243
        $region74: #{tpu_custom_call.1} parent=47 // pred_check_branch
          %485 = sbr.rel (%p483) target = $region76
        $region75: #{tpu_custom_call.1} parent=47 // pred_region
          %486 = dma.done %s479, 128
        $region76: #{tpu_custom_call.1} parent=47 // pred_fallthru
          _
        %s487 = sand.u32 %s69, 1
        %s488 = scalar_lea.sflag [#allocation7], %s487
        %s489 = sand.u32 %s69, 1
        %s490 = smul.addr %s489, 16
        %s491 = scalar_lea.vmem [#allocation6], %s490
        %p492 = pneg %p82
        %p493 = pneg %p79
        %s494 = sand.u32 %s31, 1
        %s495 = scalar_lea.sflag [#allocation10], %s494
        %s496 = sand.u32 %s99, 1
        %s497 = smul.addr %s496, 16
        %s498 = scalar_lea.vmem [#allocation9], %s497
        %p499 = pneg %p112
        %p500 = pneg %p109
        %s501 = sand.u32 %s31, 1
        %s502 = scalar_lea.sflag [#allocation10], %s501
        %s503 = sand.u32 %s129, 1
        %s504 = smul.addr %s503, 16
        %s505 = scalar_lea.vmem [#allocation11], %s504
        %p506 = pneg %p142
        %p507 = pneg %p139
        %p508 = pneg %p168
        %p509 = pneg %p165
        %p510 = pneg %p189
        %p511 = pneg %p186
        %s512 = sand.u32 %s31, 1
        %s513 = scalar_lea.sflag [#allocation16], %s512
        %s514 = sand.u32 %s204, 1
        %s515 = smul.addr %s514, 8
        %s516 = scalar_lea.vmem [#allocation15], %s515
        %p517 = pneg %p217
        %p518 = pneg %p214
        %s519 = sand.u32 %s31, 1
        %s520 = scalar_lea.sflag [#allocation16], %s519
        %s521 = sand.u32 %s230, 1
        %s522 = smul.addr %s521, 8
        %s523 = scalar_lea.vmem [#allocation17], %s522
        %p524 = pneg %p243
        %p525 = pneg %p240
        %p526 = pneg %p271
        %p527 = pneg %p268
        %s528 = sand.u32 %s258, 1
        %s529 = scalar_lea.sflag [#allocation8], %s528
        %s530 = sand.u32 %s258, 1
        %s531 = smul.addr %s530, 8
        %s532 = scalar_lea.vmem [#allocation18], %s531
        %p534 = scmp.eq.s32.totalorder %s39, 0
        %p535 = scmp.eq.s32.totalorder %s40, 0
        %p536 = pnand %p534, %p535
        %p537 = pneg %p536
        // Predicated region
        $region77: #{tpu_custom_call.1} parent=47 // pred_check
          _
        $region78: #{tpu_custom_call.1} parent=47 // pred_check_branch
          %539 = sbr.rel (%p536) target = $region80
        $region79: #{tpu_custom_call.1} parent=47 // pred_region
          %vm540 = vcmask 261120
          %541 = vst.msk [vmem:[#allocation5] sm:$0xff] %vm540, 0.0
        $region80: #{tpu_custom_call.1} parent=47 // pred_fallthru
          _
        // Predicated region
        $region81: #{tpu_custom_call.1} parent=47 // pred_check
          %p542 = pneg %p535
        $region82: #{tpu_custom_call.1} parent=47 // pred_check_branch
          %544 = sbr.rel (%p542) target = $region84
        $region83: #{tpu_custom_call.1} parent=47 // pred_region
          %vm545 = vcmask 7168
          %546 = vst.msk [vmem:[#allocation2] sm:$0xff] %vm545, -inf
          %547 = vst.msk [vmem:[#allocation2 + $0x8] sm:$0xff] %vm545, -inf
          %548 = vst.msk [vmem:[#allocation2 + $0x10] sm:$0xff] %vm545, -inf
          %549 = vst.msk [vmem:[#allocation2 + $0x18] sm:$0xff] %vm545, -inf
          %550 = vst.msk [vmem:[#allocation3] sm:$0xff] %vm545, 0.0
          %551 = vst.msk [vmem:[#allocation3 + $0x8] sm:$0xff] %vm545, 0.0
          %552 = vst.msk [vmem:[#allocation3 + $0x10] sm:$0xff] %vm545, 0.0
          %553 = vst.msk [vmem:[#allocation3 + $0x18] sm:$0xff] %vm545, 0.0
          %vm554 = vcmask 64512
          %555 = vst.msk [vmem:[#allocation4] sm:$0xff] %vm554, 0.0
          %556 = vst.msk [vmem:[#allocation4 + $0x8] sm:$0xff] %vm554, 0.0
          %557 = vst.msk [vmem:[#allocation4 + $0x10] sm:$0xff] %vm554, 0.0
          %558 = vst.msk [vmem:[#allocation4 + $0x18] sm:$0xff] %vm554, 0.0
        $region84: #{tpu_custom_call.1} parent=47 // pred_fallthru
          _
        %v559 = vld [vmem:[%s438] sm:$0xf]
        %v560 = vld [vmem:[%s438 + $0x4] sm:$0xf]
        %v561 = vld [vmem:[%s438 + $0x8] sm:$0xf]
        %v562 = vld [vmem:[%s438 + $0xc] sm:$0xf]
        %v563 = vld [vmem:[%s447] sm:$0xf]
        %v564 = vld [vmem:[%s447 + $0x4] sm:$0xf]
        %v565 = vld [vmem:[%s447 + $0x8] sm:$0xf]
        %v566 = vld [vmem:[%s447 + $0xc] sm:$0xf]
        %v567 = vld [vmem:[%s456] sm:$0xf]
        %v568 = vld [vmem:[%s456 + $0x4] sm:$0xf]
        %v569 = vld [vmem:[%s456 + $0x8] sm:$0xf]
        %v570 = vld [vmem:[%s456 + $0xc] sm:$0xf]
        %vm571 = vcmask 64512
        %v573 = vsel %vm571, %v559, 0
        %v576 = vsel %vm571, %v563, 0
        %578 = vmatprep.subr.bf16.mxu0 0
        %579 = vmatpush1.bf16.xpose.msra.mxu0 %v576
        %580 = vmatprep.subr.bf16.mxu0 0
        %581 = vmatpush1.bf16.xpose.msra.mxu0 0
        %582 = vmatprep.subr.bf16.mxu0 0
        %583 = vmatpush1.bf16.xpose.msra.mxu0 0
        %584 = vmatprep.subr.bf16.mxu0 0
        %585 = vmatpush1.bf16.xpose.msra.mxu0 0
        %586 = vmatprep.subr.bf16.mxu0 0
        %587 = vmatpush1.bf16.xpose.msra.mxu0 0
        %588 = vmatprep.subr.bf16.mxu0 0
        %589 = vmatpush1.bf16.xpose.msra.mxu0 0
        %590 = vmatprep.subr.bf16.mxu0 0
        %591 = vmatpush1.bf16.xpose.msra.mxu0 0
        %592 = vmatprep.subr.bf16.mxu0 0
        %593 = vmatpush1.bf16.xpose.msra.mxu0 0
        %594 = vmatprep.subr.bf16.mxu0 0
        %595 = vmatpush1.bf16.xpose.msra.mxu0 0
        %596 = vmatprep.subr.bf16.mxu0 0
        %597 = vmatpush1.bf16.xpose.msra.mxu0 0
        %598 = vmatprep.subr.bf16.mxu0 0
        %599 = vmatpush1.bf16.xpose.msra.mxu0 0
        %600 = vmatprep.subr.bf16.mxu0 0
        %601 = vmatpush1.bf16.xpose.msra.mxu0 0
        %602 = vmatprep.subr.bf16.mxu0 0
        %603 = vmatpush1.bf16.xpose.msra.mxu0 0
        %604 = vmatprep.subr.bf16.mxu0 0
        %605 = vmatpush1.bf16.xpose.msra.mxu0 0
        %606 = vmatprep.subr.bf16.mxu0 0
        %607 = vmatpush1.bf16.xpose.msra.mxu0 0
        %608 = vmatprep.subr.bf16.mxu0 0
        %609 = vmatpush1.bf16.xpose.msra.mxu0 0
        %610 = vmatprep.mubr.bf16.mxu0 0
        %611 = vmatmul.mubr.bf16.gmra.mrb[0].mxu0 %v573
        %v612 = vpop.f32.mrb[0].mxu0
        %v613 = vadd.f32 0.0, %v612
        %v614 = vpop.f32.mrb[0].mxu0
        %v615 = vpop.f32.mrb[0].mxu0
        %v616 = vpop.f32.mrb[0].mxu0
        %617 = vdwg.mxu0
        %v619 = vsel %vm571, %v560, 0
        %v622 = vsel %vm571, %v564, 0
        %624 = vmatprep.subr.bf16.mxu0 0
        %625 = vmatpush1.bf16.xpose.msra.mxu0 %v622
        %626 = vmatprep.subr.bf16.mxu0 0
        %627 = vmatpush1.bf16.xpose.msra.mxu0 0
        %628 = vmatprep.subr.bf16.mxu0 0
        %629 = vmatpush1.bf16.xpose.msra.mxu0 0
        %630 = vmatprep.subr.bf16.mxu0 0
        %631 = vmatpush1.bf16.xpose.msra.mxu0 0
        %632 = vmatprep.subr.bf16.mxu0 0
        %633 = vmatpush1.bf16.xpose.msra.mxu0 0
        %634 = vmatprep.subr.bf16.mxu0 0
        %635 = vmatpush1.bf16.xpose.msra.mxu0 0
        %636 = vmatprep.subr.bf16.mxu0 0
        %637 = vmatpush1.bf16.xpose.msra.mxu0 0
        %638 = vmatprep.subr.bf16.mxu0 0
        %639 = vmatpush1.bf16.xpose.msra.mxu0 0
        %640 = vmatprep.subr.bf16.mxu0 0
        %641 = vmatpush1.bf16.xpose.msra.mxu0 0
        %642 = vmatprep.subr.bf16.mxu0 0
        %643 = vmatpush1.bf16.xpose.msra.mxu0 0
        %644 = vmatprep.subr.bf16.mxu0 0
        %645 = vmatpush1.bf16.xpose.msra.mxu0 0
        %646 = vmatprep.subr.bf16.mxu0 0
        %647 = vmatpush1.bf16.xpose.msra.mxu0 0
        %648 = vmatprep.subr.bf16.mxu0 0
        %649 = vmatpush1.bf16.xpose.msra.mxu0 0
        %650 = vmatprep.subr.bf16.mxu0 0
        %651 = vmatpush1.bf16.xpose.msra.mxu0 0
        %652 = vmatprep.subr.bf16.mxu0 0
        %653 = vmatpush1.bf16.xpose.msra.mxu0 0
        %654 = vmatprep.subr.bf16.mxu0 0
        %655 = vmatpush1.bf16.xpose.msra.mxu0 0
        %656 = vmatprep.mubr.bf16.mxu0 0
        %657 = vmatmul.mubr.bf16.gmra.mrb[0].mxu0 %v619
        %v658 = vpop.f32.mrb[0].mxu0
        %v659 = vadd.f32 0.0, %v658
        %v660 = vpop.f32.mrb[0].mxu0
        %v661 = vpop.f32.mrb[0].mxu0
        %v662 = vpop.f32.mrb[0].mxu0
        %663 = vdwg.mxu0
        %v665 = vsel %vm571, %v561, 0
        %v668 = vsel %vm571, %v565, 0
        %670 = vmatprep.subr.bf16.mxu0 0
        %671 = vmatpush1.bf16.xpose.msra.mxu0 %v668
        %672 = vmatprep.subr.bf16.mxu0 0
        %673 = vmatpush1.bf16.xpose.msra.mxu0 0
        %674 = vmatprep.subr.bf16.mxu0 0
        %675 = vmatpush1.bf16.xpose.msra.mxu0 0
        %676 = vmatprep.subr.bf16.mxu0 0
        %677 = vmatpush1.bf16.xpose.msra.mxu0 0
        %678 = vmatprep.subr.bf16.mxu0 0
        %679 = vmatpush1.bf16.xpose.msra.mxu0 0
        %680 = vmatprep.subr.bf16.mxu0 0
        %681 = vmatpush1.bf16.xpose.msra.mxu0 0
        %682 = vmatprep.subr.bf16.mxu0 0
        %683 = vmatpush1.bf16.xpose.msra.mxu0 0
        %684 = vmatprep.subr.bf16.mxu0 0
        %685 = vmatpush1.bf16.xpose.msra.mxu0 0
        %686 = vmatprep.subr.bf16.mxu0 0
        %687 = vmatpush1.bf16.xpose.msra.mxu0 0
        %688 = vmatprep.subr.bf16.mxu0 0
        %689 = vmatpush1.bf16.xpose.msra.mxu0 0
        %690 = vmatprep.subr.bf16.mxu0 0
        %691 = vmatpush1.bf16.xpose.msra.mxu0 0
        %692 = vmatprep.subr.bf16.mxu0 0
        %693 = vmatpush1.bf16.xpose.msra.mxu0 0
        %694 = vmatprep.subr.bf16.mxu0 0
        %695 = vmatpush1.bf16.xpose.msra.mxu0 0
        %696 = vmatprep.subr.bf16.mxu0 0
        %697 = vmatpush1.bf16.xpose.msra.mxu0 0
        %698 = vmatprep.subr.bf16.mxu0 0
        %699 = vmatpush1.bf16.xpose.msra.mxu0 0
        %700 = vmatprep.subr.bf16.mxu0 0
        %701 = vmatpush1.bf16.xpose.msra.mxu0 0
        %702 = vmatprep.mubr.bf16.mxu0 0
        %703 = vmatmul.mubr.bf16.gmra.mrb[0].mxu0 %v665
        %v704 = vpop.f32.mrb[0].mxu0
        %v705 = vadd.f32 0.0, %v704
        %v706 = vpop.f32.mrb[0].mxu0
        %v707 = vpop.f32.mrb[0].mxu0
        %v708 = vpop.f32.mrb[0].mxu0
        %709 = vdwg.mxu0
        %v711 = vsel %vm571, %v562, 0
        %v714 = vsel %vm571, %v566, 0
        %716 = vmatprep.subr.bf16.mxu0 0
        %717 = vmatpush1.bf16.xpose.msra.mxu0 %v714
        %718 = vmatprep.subr.bf16.mxu0 0
        %719 = vmatpush1.bf16.xpose.msra.mxu0 0
        %720 = vmatprep.subr.bf16.mxu0 0
        %721 = vmatpush1.bf16.xpose.msra.mxu0 0
        %722 = vmatprep.subr.bf16.mxu0 0
        %723 = vmatpush1.bf16.xpose.msra.mxu0 0
        %724 = vmatprep.subr.bf16.mxu0 0
        %725 = vmatpush1.bf16.xpose.msra.mxu0 0
        %726 = vmatprep.subr.bf16.mxu0 0
        %727 = vmatpush1.bf16.xpose.msra.mxu0 0
        %728 = vmatprep.subr.bf16.mxu0 0
        %729 = vmatpush1.bf16.xpose.msra.mxu0 0
        %730 = vmatprep.subr.bf16.mxu0 0
        %731 = vmatpush1.bf16.xpose.msra.mxu0 0
        %732 = vmatprep.subr.bf16.mxu0 0
        %733 = vmatpush1.bf16.xpose.msra.mxu0 0
        %734 = vmatprep.subr.bf16.mxu0 0
        %735 = vmatpush1.bf16.xpose.msra.mxu0 0
        %736 = vmatprep.subr.bf16.mxu0 0
        %737 = vmatpush1.bf16.xpose.msra.mxu0 0
        %738 = vmatprep.subr.bf16.mxu0 0
        %739 = vmatpush1.bf16.xpose.msra.mxu0 0
        %740 = vmatprep.subr.bf16.mxu0 0
        %741 = vmatpush1.bf16.xpose.msra.mxu0 0
        %742 = vmatprep.subr.bf16.mxu0 0
        %743 = vmatpush1.bf16.xpose.msra.mxu0 0
        %744 = vmatprep.subr.bf16.mxu0 0
        %745 = vmatpush1.bf16.xpose.msra.mxu0 0
        %746 = vmatprep.subr.bf16.mxu0 0
        %747 = vmatpush1.bf16.xpose.msra.mxu0 0
        %748 = vmatprep.mubr.bf16.mxu0 0
        %749 = vmatmul.mubr.bf16.gmra.mrb[0].mxu0 %v711
        %v750 = vpop.f32.mrb[0].mxu0
        %v751 = vadd.f32 0.0, %v750
        %v752 = vpop.f32.mrb[0].mxu0
        %v753 = vpop.f32.mrb[0].mxu0
        %v754 = vpop.f32.mrb[0].mxu0
        %755 = vdwg.mxu0
        %v756 = vld [vmem:[#allocation2] sm:$0xff]
        %v757 = vld [vmem:[#allocation2 + $0x8] sm:$0xff]
        %v758 = vld [vmem:[#allocation2 + $0x10] sm:$0xff]
        %v759 = vld [vmem:[#allocation2 + $0x18] sm:$0xff]
        %v760 = vsel %vm571, %v613, -inf
        %761 = vmax.xlane.f32.xlu0 %v760
        %v762 = vpop.xlane.xlu0 %761
        %v763 = vsel %vm571, %v659, -inf
        %764 = vmax.xlane.f32.xlu0 %v763
        %v765 = vpop.xlane.xlu0 %764
        %v766 = vsel %vm571, %v705, -inf
        %767 = vmax.xlane.f32.xlu0 %v766
        %v768 = vpop.xlane.xlu0 %767
        %v769 = vsel %vm571, %v751, -inf
        %770 = vmax.xlane.f32.xlu0 %v769
        %v771 = vpop.xlane.xlu0 %770
        %v772 = vmax.f32 %v756, %v762
        %v773 = vmax.f32 %v757, %v765
        %v774 = vmax.f32 %v758, %v768
        %v775 = vmax.f32 %v759, %v771
        %v776 = vsub.f32 %v756, %v772
        %v777 = vsub.f32 %v757, %v773
        %v778 = vsub.f32 %v758, %v774
        %v779 = vsub.f32 %v759, %v775
        %v780 = vmul.f32 %v776, 1.442695
        %v781 = vpow.pop %v780
        %v782 = vmul.f32 %v777, 1.442695
        %v783 = vpow.pop %v782
        %v784 = vmul.f32 %v778, 1.442695
        %v785 = vpow.pop %v784
        %v786 = vmul.f32 %v779, 1.442695
        %v787 = vpow.pop %v786
        %789 = vset.pattern.permute.xlu0 0
        %790 = vperm.xlu0 %789, %v772
        %v791 = vpop.permute.xlu0 %790
        %794 = vset.pattern.permute.xlu0 0
        %795 = vperm.xlu0 %794, %v773
        %v796 = vpop.permute.xlu0 %795
        %799 = vset.pattern.permute.xlu0 0
        %800 = vperm.xlu0 %799, %v774
        %v801 = vpop.permute.xlu0 %800
        %804 = vset.pattern.permute.xlu0 0
        %805 = vperm.xlu0 %804, %v775
        %v806 = vpop.permute.xlu0 %805
        %v808 = vsub.f32 %v613, %v791
        %v809 = vsub.f32 %v659, %v796
        %v810 = vsub.f32 %v705, %v801
        %v811 = vsub.f32 %v751, %v806
        %v812 = vmul.f32 %v808, 1.442695
        %v813 = vpow.pop %v812
        %v814 = vmul.f32 %v809, 1.442695
        %v815 = vpow.pop %v814
        %v816 = vmul.f32 %v810, 1.442695
        %v817 = vpow.pop %v816
        %v818 = vmul.f32 %v811, 1.442695
        %v819 = vpow.pop %v818
        %v820 = vld [vmem:[#allocation3] sm:$0xff]
        %v821 = vld [vmem:[#allocation3 + $0x8] sm:$0xff]
        %v822 = vld [vmem:[#allocation3 + $0x10] sm:$0xff]
        %v823 = vld [vmem:[#allocation3 + $0x18] sm:$0xff]
        %v824 = vmul.f32 %v781, %v820
        %v825 = vmul.f32 %v783, %v821
        %v826 = vmul.f32 %v785, %v822
        %v827 = vmul.f32 %v787, %v823
        %v828 = vsel %vm571, %v813, 0.0
        %829 = vadd.xlane.f32.xlu0 %v828
        %v830 = vpop.xlane.xlu0 %829
        %v831 = vsel %vm571, %v815, 0.0
        %832 = vadd.xlane.f32.xlu0 %v831
        %v833 = vpop.xlane.xlu0 %832
        %v834 = vsel %vm571, %v817, 0.0
        %835 = vadd.xlane.f32.xlu0 %v834
        %v836 = vpop.xlane.xlu0 %835
        %v837 = vsel %vm571, %v819, 0.0
        %838 = vadd.xlane.f32.xlu0 %v837
        %v839 = vpop.xlane.xlu0 %838
        %v840 = vadd.f32 %v824, %v830
        %v841 = vadd.f32 %v825, %v833
        %v842 = vadd.f32 %v826, %v836
        %v843 = vadd.f32 %v827, %v839
        %vm844 = vcmask 7168
        %845 = vst.msk [vmem:[#allocation3] sm:$0xff] %vm844, %v840
        %846 = vst.msk [vmem:[#allocation3 + $0x8] sm:$0xff] %vm844, %v841
        %847 = vst.msk [vmem:[#allocation3 + $0x10] sm:$0xff] %vm844, %v842
        %848 = vst.msk [vmem:[#allocation3 + $0x18] sm:$0xff] %vm844, %v843
        %v849 = vpack.c.bf16 %v813, %v813
        %v850 = vpack.c.bf16 %v815, %v815
        %v851 = vpack.c.bf16 %v817, %v817
        %v852 = vpack.c.bf16 %v819, %v819
        %v854 = vsel %vm571, %v849, 0
        %vm856 = vcmask 1043456
        %v858 = vsel %vm856, %v567, 0
        %860 = vmatprep.subr.bf16.mxu0 0
        %861 = vmatpush1.bf16.msra.mxu0 %v858
        %862 = vmatprep.subr.bf16.mxu0 0
        %863 = vmatpush1.bf16.msra.mxu0 0
        %864 = vmatprep.subr.bf16.mxu0 0
        %865 = vmatpush1.bf16.msra.mxu0 0
        %866 = vmatprep.subr.bf16.mxu0 0
        %867 = vmatpush1.bf16.msra.mxu0 0
        %868 = vmatprep.subr.bf16.mxu0 0
        %869 = vmatpush1.bf16.msra.mxu0 0
        %870 = vmatprep.subr.bf16.mxu0 0
        %871 = vmatpush1.bf16.msra.mxu0 0
        %872 = vmatprep.subr.bf16.mxu0 0
        %873 = vmatpush1.bf16.msra.mxu0 0
        %874 = vmatprep.subr.bf16.mxu0 0
        %875 = vmatpush1.bf16.msra.mxu0 0
        %876 = vmatprep.subr.bf16.mxu0 0
        %877 = vmatpush1.bf16.msra.mxu0 0
        %878 = vmatprep.subr.bf16.mxu0 0
        %879 = vmatpush1.bf16.msra.mxu0 0
        %880 = vmatprep.subr.bf16.mxu0 0
        %881 = vmatpush1.bf16.msra.mxu0 0
        %882 = vmatprep.subr.bf16.mxu0 0
        %883 = vmatpush1.bf16.msra.mxu0 0
        %884 = vmatprep.subr.bf16.mxu0 0
        %885 = vmatpush1.bf16.msra.mxu0 0
        %886 = vmatprep.subr.bf16.mxu0 0
        %887 = vmatpush1.bf16.msra.mxu0 0
        %888 = vmatprep.subr.bf16.mxu0 0
        %889 = vmatpush1.bf16.msra.mxu0 0
        %890 = vmatprep.subr.bf16.mxu0 0
        %891 = vmatpush1.bf16.msra.mxu0 0
        %892 = vmatprep.mubr.bf16.mxu0 0
        %893 = vmatmul.mubr.bf16.gmra.mrb[0].mxu0 %v854
        %v894 = vpop.f32.mrb[0].mxu0
        %v895 = vadd.f32 0.0, %v894
        %v896 = vpop.f32.mrb[0].mxu0
        %v897 = vpop.f32.mrb[0].mxu0
        %v898 = vpop.f32.mrb[0].mxu0
        %899 = vdwg.mxu0
        %v901 = vsel %vm571, %v850, 0
        %v904 = vsel %vm856, %v568, 0
        %906 = vmatprep.subr.bf16.mxu0 0
        %907 = vmatpush1.bf16.msra.mxu0 %v904
        %908 = vmatprep.subr.bf16.mxu0 0
        %909 = vmatpush1.bf16.msra.mxu0 0
        %910 = vmatprep.subr.bf16.mxu0 0
        %911 = vmatpush1.bf16.msra.mxu0 0
        %912 = vmatprep.subr.bf16.mxu0 0
        %913 = vmatpush1.bf16.msra.mxu0 0
        %914 = vmatprep.subr.bf16.mxu0 0
        %915 = vmatpush1.bf16.msra.mxu0 0
        %916 = vmatprep.subr.bf16.mxu0 0
        %917 = vmatpush1.bf16.msra.mxu0 0
        %918 = vmatprep.subr.bf16.mxu0 0
        %919 = vmatpush1.bf16.msra.mxu0 0
        %920 = vmatprep.subr.bf16.mxu0 0
        %921 = vmatpush1.bf16.msra.mxu0 0
        %922 = vmatprep.subr.bf16.mxu0 0
        %923 = vmatpush1.bf16.msra.mxu0 0
        %924 = vmatprep.subr.bf16.mxu0 0
        %925 = vmatpush1.bf16.msra.mxu0 0
        %926 = vmatprep.subr.bf16.mxu0 0
        %927 = vmatpush1.bf16.msra.mxu0 0
        %928 = vmatprep.subr.bf16.mxu0 0
        %929 = vmatpush1.bf16.msra.mxu0 0
        %930 = vmatprep.subr.bf16.mxu0 0
        %931 = vmatpush1.bf16.msra.mxu0 0
        %932 = vmatprep.subr.bf16.mxu0 0
        %933 = vmatpush1.bf16.msra.mxu0 0
        %934 = vmatprep.subr.bf16.mxu0 0
        %935 = vmatpush1.bf16.msra.mxu0 0
        %936 = vmatprep.subr.bf16.mxu0 0
        %937 = vmatpush1.bf16.msra.mxu0 0
        %938 = vmatprep.mubr.bf16.mxu0 0
        %939 = vmatmul.mubr.bf16.gmra.mrb[0].mxu0 %v901
        %v940 = vpop.f32.mrb[0].mxu0
        %v941 = vadd.f32 0.0, %v940
        %v942 = vpop.f32.mrb[0].mxu0
        %v943 = vpop.f32.mrb[0].mxu0
        %v944 = vpop.f32.mrb[0].mxu0
        %945 = vdwg.mxu0
        %v947 = vsel %vm571, %v851, 0
        %v950 = vsel %vm856, %v569, 0
        %952 = vmatprep.subr.bf16.mxu0 0
        %953 = vmatpush1.bf16.msra.mxu0 %v950
        %954 = vmatprep.subr.bf16.mxu0 0
        %955 = vmatpush1.bf16.msra.mxu0 0
        %956 = vmatprep.subr.bf16.mxu0 0
        %957 = vmatpush1.bf16.msra.mxu0 0
        %958 = vmatprep.subr.bf16.mxu0 0
        %959 = vmatpush1.bf16.msra.mxu0 0
        %960 = vmatprep.subr.bf16.mxu0 0
        %961 = vmatpush1.bf16.msra.mxu0 0
        %962 = vmatprep.subr.bf16.mxu0 0
        %963 = vmatpush1.bf16.msra.mxu0 0
        %964 = vmatprep.subr.bf16.mxu0 0
        %965 = vmatpush1.bf16.msra.mxu0 0
        %966 = vmatprep.subr.bf16.mxu0 0
        %967 = vmatpush1.bf16.msra.mxu0 0
        %968 = vmatprep.subr.bf16.mxu0 0
        %969 = vmatpush1.bf16.msra.mxu0 0
        %970 = vmatprep.subr.bf16.mxu0 0
        %971 = vmatpush1.bf16.msra.mxu0 0
        %972 = vmatprep.subr.bf16.mxu0 0
        %973 = vmatpush1.bf16.msra.mxu0 0
        %974 = vmatprep.subr.bf16.mxu0 0
        %975 = vmatpush1.bf16.msra.mxu0 0
        %976 = vmatprep.subr.bf16.mxu0 0
        %977 = vmatpush1.bf16.msra.mxu0 0
        %978 = vmatprep.subr.bf16.mxu0 0
        %979 = vmatpush1.bf16.msra.mxu0 0
        %980 = vmatprep.subr.bf16.mxu0 0
        %981 = vmatpush1.bf16.msra.mxu0 0
        %982 = vmatprep.subr.bf16.mxu0 0
        %983 = vmatpush1.bf16.msra.mxu0 0
        %984 = vmatprep.mubr.bf16.mxu0 0
        %985 = vmatmul.mubr.bf16.gmra.mrb[0].mxu0 %v947
        %v986 = vpop.f32.mrb[0].mxu0
        %v987 = vadd.f32 0.0, %v986
        %v988 = vpop.f32.mrb[0].mxu0
        %v989 = vpop.f32.mrb[0].mxu0
        %v990 = vpop.f32.mrb[0].mxu0
        %991 = vdwg.mxu0
        %v993 = vsel %vm571, %v852, 0
        %v996 = vsel %vm856, %v570, 0
        %998 = vmatprep.subr.bf16.mxu0 0
        %999 = vmatpush1.bf16.msra.mxu0 %v996
        %1000 = vmatprep.subr.bf16.mxu0 0
        %1001 = vmatpush1.bf16.msra.mxu0 0
        %1002 = vmatprep.subr.bf16.mxu0 0
        %1003 = vmatpush1.bf16.msra.mxu0 0
        %1004 = vmatprep.subr.bf16.mxu0 0
        %1005 = vmatpush1.bf16.msra.mxu0 0
        %1006 = vmatprep.subr.bf16.mxu0 0
        %1007 = vmatpush1.bf16.msra.mxu0 0
        %1008 = vmatprep.subr.bf16.mxu0 0
        %1009 = vmatpush1.bf16.msra.mxu0 0
        %1010 = vmatprep.subr.bf16.mxu0 0
        %1011 = vmatpush1.bf16.msra.mxu0 0
        %1012 = vmatprep.subr.bf16.mxu0 0
        %1013 = vmatpush1.bf16.msra.mxu0 0
        %1014 = vmatprep.subr.bf16.mxu0 0
        %1015 = vmatpush1.bf16.msra.mxu0 0
        %1016 = vmatprep.subr.bf16.mxu0 0
        %1017 = vmatpush1.bf16.msra.mxu0 0
        %1018 = vmatprep.subr.bf16.mxu0 0
        %1019 = vmatpush1.bf16.msra.mxu0 0
        %1020 = vmatprep.subr.bf16.mxu0 0
        %1021 = vmatpush1.bf16.msra.mxu0 0
        %1022 = vmatprep.subr.bf16.mxu0 0
        %1023 = vmatpush1.bf16.msra.mxu0 0
        %1024 = vmatprep.subr.bf16.mxu0 0
        %1025 = vmatpush1.bf16.msra.mxu0 0
        %1026 = vmatprep.subr.bf16.mxu0 0
        %1027 = vmatpush1.bf16.msra.mxu0 0
        %1028 = vmatprep.subr.bf16.mxu0 0
        %1029 = vmatpush1.bf16.msra.mxu0 0
        %1030 = vmatprep.mubr.bf16.mxu0 0
        %1031 = vmatmul.mubr.bf16.gmra.mrb[0].mxu0 %v993
        %v1032 = vpop.f32.mrb[0].mxu0
        %v1033 = vadd.f32 0.0, %v1032
        %v1034 = vpop.f32.mrb[0].mxu0
        %v1035 = vpop.f32.mrb[0].mxu0
        %v1036 = vpop.f32.mrb[0].mxu0
        %1037 = vdwg.mxu0
        %v1038 = vld [vmem:[#allocation4] sm:$0xff]
        %v1039 = vld [vmem:[#allocation4 + $0x8] sm:$0xff]
        %v1040 = vld [vmem:[#allocation4 + $0x10] sm:$0xff]
        %v1041 = vld [vmem:[#allocation4 + $0x18] sm:$0xff]
        %1043 = vset.pattern.permute.xlu0 0
        %1044 = vperm.xlu0 %1043, %v781
        %v1045 = vpop.permute.xlu0 %1044
        %1048 = vset.pattern.permute.xlu0 0
        %1049 = vperm.xlu0 %1048, %v783
        %v1050 = vpop.permute.xlu0 %1049
        %1053 = vset.pattern.permute.xlu0 0
        %1054 = vperm.xlu0 %1053, %v785
        %v1055 = vpop.permute.xlu0 %1054
        %1058 = vset.pattern.permute.xlu0 0
        %1059 = vperm.xlu0 %1058, %v787
        %v1060 = vpop.permute.xlu0 %1059
        %v1062 = vmul.f32 %v1045, %v1038
        %v1063 = vmul.f32 %v1050, %v1039
        %v1064 = vmul.f32 %v1055, %v1040
        %v1065 = vmul.f32 %v1060, %v1041
        %v1066 = vadd.f32 %v1062, %v895
        %v1067 = vadd.f32 %v1063, %v941
        %v1068 = vadd.f32 %v1064, %v987
        %v1069 = vadd.f32 %v1065, %v1033
        %1070 = vst.msk [vmem:[#allocation4] sm:$0xff] %vm571, %v1066
        %1071 = vst.msk [vmem:[#allocation4 + $0x8] sm:$0xff] %vm571, %v1067
        %1072 = vst.msk [vmem:[#allocation4 + $0x10] sm:$0xff] %vm571, %v1068
        %1073 = vst.msk [vmem:[#allocation4 + $0x18] sm:$0xff] %vm571, %v1069
        %1074 = vst.msk [vmem:[#allocation2] sm:$0xff] %vm844, %v772
        %1075 = vst.msk [vmem:[#allocation2 + $0x8] sm:$0xff] %vm844, %v773
        %1076 = vst.msk [vmem:[#allocation2 + $0x10] sm:$0xff] %vm844, %v774
        %1077 = vst.msk [vmem:[#allocation2 + $0x18] sm:$0xff] %vm844, %v775
        %p1078 = scmp.eq.s32.totalorder %s40, 1
        // Predicated region
        $region85: #{tpu_custom_call.1} parent=47 // pred_check
          %p1079 = pneg %p1078
        $region86: #{tpu_custom_call.1} parent=47 // pred_check_branch
          %1081 = sbr.rel (%p1079) target = $region88
        $region87: #{tpu_custom_call.1} parent=47 // pred_region
          %v1082 = vld [vmem:[#allocation3] sm:$0xff]
          %v1083 = vld [vmem:[#allocation3 + $0x8] sm:$0xff]
          %v1084 = vld [vmem:[#allocation3 + $0x10] sm:$0xff]
          %v1085 = vld [vmem:[#allocation3 + $0x18] sm:$0xff]
          %v1086 = vrcp.pop %v1082
          %v1087 = vrcp.pop %v1083
          %v1088 = vrcp.pop %v1084
          %v1089 = vrcp.pop %v1085
          %v1090 = vld [vmem:[#allocation4] sm:$0xff]
          %v1091 = vld [vmem:[#allocation4 + $0x8] sm:$0xff]
          %v1092 = vld [vmem:[#allocation4 + $0x10] sm:$0xff]
          %v1093 = vld [vmem:[#allocation4 + $0x18] sm:$0xff]
          %1095 = vset.pattern.permute.xlu0 0
          %1096 = vperm.xlu0 %1095, %v1086
          %v1097 = vpop.permute.xlu0 %1096
          %1100 = vset.pattern.permute.xlu0 0
          %1101 = vperm.xlu0 %1100, %v1087
          %v1102 = vpop.permute.xlu0 %1101
          %1105 = vset.pattern.permute.xlu0 0
          %1106 = vperm.xlu0 %1105, %v1088
          %v1107 = vpop.permute.xlu0 %1106
          %1110 = vset.pattern.permute.xlu0 0
          %1111 = vperm.xlu0 %1110, %v1089
          %v1112 = vpop.permute.xlu0 %1111
          %v1114 = vmul.f32 %v1090, %v1097
          %v1115 = vmul.f32 %v1091, %v1102
          %v1116 = vmul.f32 %v1092, %v1107
          %v1117 = vmul.f32 %v1093, %v1112
          %v1118 = vpack.c.bf16 %v1114, %v1114
          %v1119 = vpack.c.bf16 %v1115, %v1115
          %v1120 = vpack.c.bf16 %v1116, %v1116
          %v1121 = vpack.c.bf16 %v1117, %v1117
          %v1122 = vld [vmem:[#allocation12] sm:$0xf]
          %v1123 = vld [vmem:[#allocation12 + $0x4] sm:$0xf]
          %v1124 = vld [vmem:[#allocation12 + $0x8] sm:$0xf]
          %v1125 = vld [vmem:[#allocation12 + $0xc] sm:$0xf]
          %v1127 = vsel %vm571, %v1118, 0
          %v1130 = vsel %vm856, %v1122, 0
          %1132 = vmatprep.subr.bf16.mxu0 0
          %1133 = vmatpush1.bf16.msra.mxu0 %v1130
          %1134 = vmatprep.subr.bf16.mxu0 0
          %1135 = vmatpush1.bf16.msra.mxu0 0
          %1136 = vmatprep.subr.bf16.mxu0 0
          %1137 = vmatpush1.bf16.msra.mxu0 0
          %1138 = vmatprep.subr.bf16.mxu0 0
          %1139 = vmatpush1.bf16.msra.mxu0 0
          %1140 = vmatprep.subr.bf16.mxu0 0
          %1141 = vmatpush1.bf16.msra.mxu0 0
          %1142 = vmatprep.subr.bf16.mxu0 0
          %1143 = vmatpush1.bf16.msra.mxu0 0
          %1144 = vmatprep.subr.bf16.mxu0 0
          %1145 = vmatpush1.bf16.msra.mxu0 0
          %1146 = vmatprep.subr.bf16.mxu0 0
          %1147 = vmatpush1.bf16.msra.mxu0 0
          %1148 = vmatprep.subr.bf16.mxu0 0
          %1149 = vmatpush1.bf16.msra.mxu0 0
          %1150 = vmatprep.subr.bf16.mxu0 0
          %1151 = vmatpush1.bf16.msra.mxu0 0
          %1152 = vmatprep.subr.bf16.mxu0 0
          %1153 = vmatpush1.bf16.msra.mxu0 0
          %1154 = vmatprep.subr.bf16.mxu0 0
          %1155 = vmatpush1.bf16.msra.mxu0 0
          %1156 = vmatprep.subr.bf16.mxu0 0
          %1157 = vmatpush1.bf16.msra.mxu0 0
          %1158 = vmatprep.subr.bf16.mxu0 0
          %1159 = vmatpush1.bf16.msra.mxu0 0
          %1160 = vmatprep.subr.bf16.mxu0 0
          %1161 = vmatpush1.bf16.msra.mxu0 0
          %1162 = vmatprep.subr.bf16.mxu0 0
          %1163 = vmatpush1.bf16.msra.mxu0 0
          %1164 = vmatprep.mubr.bf16.mxu0 0
          %1165 = vmatmul.mubr.bf16.gmra.mrb[0].mxu0 %v1127
          %v1166 = vpop.f32.mrb[0].mxu0
          %v1167 = vadd.f32 0.0, %v1166
          %v1168 = vpop.f32.mrb[0].mxu0
          %v1169 = vpop.f32.mrb[0].mxu0
          %v1170 = vpop.f32.mrb[0].mxu0
          %1171 = vdwg.mxu0
          %v1173 = vsel %vm571, %v1119, 0
          %v1176 = vsel %vm856, %v1123, 0
          %1178 = vmatprep.subr.bf16.mxu0 0
          %1179 = vmatpush1.bf16.msra.mxu0 %v1176
          %1180 = vmatprep.subr.bf16.mxu0 0
          %1181 = vmatpush1.bf16.msra.mxu0 0
          %1182 = vmatprep.subr.bf16.mxu0 0
          %1183 = vmatpush1.bf16.msra.mxu0 0
          %1184 = vmatprep.subr.bf16.mxu0 0
          %1185 = vmatpush1.bf16.msra.mxu0 0
          %1186 = vmatprep.subr.bf16.mxu0 0
          %1187 = vmatpush1.bf16.msra.mxu0 0
          %1188 = vmatprep.subr.bf16.mxu0 0
          %1189 = vmatpush1.bf16.msra.mxu0 0
          %1190 = vmatprep.subr.bf16.mxu0 0
          %1191 = vmatpush1.bf16.msra.mxu0 0
          %1192 = vmatprep.subr.bf16.mxu0 0
          %1193 = vmatpush1.bf16.msra.mxu0 0
          %1194 = vmatprep.subr.bf16.mxu0 0
          %1195 = vmatpush1.bf16.msra.mxu0 0
          %1196 = vmatprep.subr.bf16.mxu0 0
          %1197 = vmatpush1.bf16.msra.mxu0 0
          %1198 = vmatprep.subr.bf16.mxu0 0
          %1199 = vmatpush1.bf16.msra.mxu0 0
          %1200 = vmatprep.subr.bf16.mxu0 0
          %1201 = vmatpush1.bf16.msra.mxu0 0
          %1202 = vmatprep.subr.bf16.mxu0 0
          %1203 = vmatpush1.bf16.msra.mxu0 0
          %1204 = vmatprep.subr.bf16.mxu0 0
          %1205 = vmatpush1.bf16.msra.mxu0 0
          %1206 = vmatprep.subr.bf16.mxu0 0
          %1207 = vmatpush1.bf16.msra.mxu0 0
          %1208 = vmatprep.subr.bf16.mxu0 0
          %1209 = vmatpush1.bf16.msra.mxu0 0
          %1210 = vmatprep.mubr.bf16.mxu0 0
          %1211 = vmatmul.mubr.bf16.gmra.mrb[0].mxu0 %v1173
          %v1212 = vpop.f32.mrb[0].mxu0
          %v1213 = vadd.f32 0.0, %v1212
          %v1214 = vpop.f32.mrb[0].mxu0
          %v1215 = vpop.f32.mrb[0].mxu0
          %v1216 = vpop.f32.mrb[0].mxu0
          %1217 = vdwg.mxu0
          %v1219 = vsel %vm571, %v1120, 0
          %v1222 = vsel %vm856, %v1124, 0
          %1224 = vmatprep.subr.bf16.mxu0 0
          %1225 = vmatpush1.bf16.msra.mxu0 %v1222
          %1226 = vmatprep.subr.bf16.mxu0 0
          %1227 = vmatpush1.bf16.msra.mxu0 0
          %1228 = vmatprep.subr.bf16.mxu0 0
          %1229 = vmatpush1.bf16.msra.mxu0 0
          %1230 = vmatprep.subr.bf16.mxu0 0
          %1231 = vmatpush1.bf16.msra.mxu0 0
          %1232 = vmatprep.subr.bf16.mxu0 0
          %1233 = vmatpush1.bf16.msra.mxu0 0
          %1234 = vmatprep.subr.bf16.mxu0 0
          %1235 = vmatpush1.bf16.msra.mxu0 0
          %1236 = vmatprep.subr.bf16.mxu0 0
          %1237 = vmatpush1.bf16.msra.mxu0 0
          %1238 = vmatprep.subr.bf16.mxu0 0
          %1239 = vmatpush1.bf16.msra.mxu0 0
          %1240 = vmatprep.subr.bf16.mxu0 0
          %1241 = vmatpush1.bf16.msra.mxu0 0
          %1242 = vmatprep.subr.bf16.mxu0 0
          %1243 = vmatpush1.bf16.msra.mxu0 0
          %1244 = vmatprep.subr.bf16.mxu0 0
          %1245 = vmatpush1.bf16.msra.mxu0 0
          %1246 = vmatprep.subr.bf16.mxu0 0
          %1247 = vmatpush1.bf16.msra.mxu0 0
          %1248 = vmatprep.subr.bf16.mxu0 0
          %1249 = vmatpush1.bf16.msra.mxu0 0
          %1250 = vmatprep.subr.bf16.mxu0 0
          %1251 = vmatpush1.bf16.msra.mxu0 0
          %1252 = vmatprep.subr.bf16.mxu0 0
          %1253 = vmatpush1.bf16.msra.mxu0 0
          %1254 = vmatprep.subr.bf16.mxu0 0
          %1255 = vmatpush1.bf16.msra.mxu0 0
          %1256 = vmatprep.mubr.bf16.mxu0 0
          %1257 = vmatmul.mubr.bf16.gmra.mrb[0].mxu0 %v1219
          %v1258 = vpop.f32.mrb[0].mxu0
          %v1259 = vadd.f32 0.0, %v1258
          %v1260 = vpop.f32.mrb[0].mxu0
          %v1261 = vpop.f32.mrb[0].mxu0
          %v1262 = vpop.f32.mrb[0].mxu0
          %1263 = vdwg.mxu0
          %v1265 = vsel %vm571, %v1121, 0
          %v1268 = vsel %vm856, %v1125, 0
          %1270 = vmatprep.subr.bf16.mxu0 0
          %1271 = vmatpush1.bf16.msra.mxu0 %v1268
          %1272 = vmatprep.subr.bf16.mxu0 0
          %1273 = vmatpush1.bf16.msra.mxu0 0
          %1274 = vmatprep.subr.bf16.mxu0 0
          %1275 = vmatpush1.bf16.msra.mxu0 0
          %1276 = vmatprep.subr.bf16.mxu0 0
          %1277 = vmatpush1.bf16.msra.mxu0 0
          %1278 = vmatprep.subr.bf16.mxu0 0
          %1279 = vmatpush1.bf16.msra.mxu0 0
          %1280 = vmatprep.subr.bf16.mxu0 0
          %1281 = vmatpush1.bf16.msra.mxu0 0
          %1282 = vmatprep.subr.bf16.mxu0 0
          %1283 = vmatpush1.bf16.msra.mxu0 0
          %1284 = vmatprep.subr.bf16.mxu0 0
          %1285 = vmatpush1.bf16.msra.mxu0 0
          %1286 = vmatprep.subr.bf16.mxu0 0
          %1287 = vmatpush1.bf16.msra.mxu0 0
          %1288 = vmatprep.subr.bf16.mxu0 0
          %1289 = vmatpush1.bf16.msra.mxu0 0
          %1290 = vmatprep.subr.bf16.mxu0 0
          %1291 = vmatpush1.bf16.msra.mxu0 0
          %1292 = vmatprep.subr.bf16.mxu0 0
          %1293 = vmatpush1.bf16.msra.mxu0 0
          %1294 = vmatprep.subr.bf16.mxu0 0
          %1295 = vmatpush1.bf16.msra.mxu0 0
          %1296 = vmatprep.subr.bf16.mxu0 0
          %1297 = vmatpush1.bf16.msra.mxu0 0
          %1298 = vmatprep.subr.bf16.mxu0 0
          %1299 = vmatpush1.bf16.msra.mxu0 0
          %1300 = vmatprep.subr.bf16.mxu0 0
          %1301 = vmatpush1.bf16.msra.mxu0 0
          %1302 = vmatprep.mubr.bf16.mxu0 0
          %1303 = vmatmul.mubr.bf16.gmra.mrb[0].mxu0 %v1265
          %v1304 = vpop.f32.mrb[0].mxu0
          %v1305 = vadd.f32 0.0, %v1304
          %v1306 = vpop.f32.mrb[0].mxu0
          %v1307 = vpop.f32.mrb[0].mxu0
          %v1308 = vpop.f32.mrb[0].mxu0
          %1309 = vdwg.mxu0
          %v1310 = vld [vmem:[#allocation5] sm:$0xff]
          %vm1311 = vcmask 261120
          %v1312 = vsel %vm1311, %v1167, 0.0
          %v1313 = vsel %vm1311, %v1213, 0.0
          %v1314 = vadd.f32 %v1312, %v1313
          %v1315 = vsel %vm1311, %v1259, 0.0
          %v1316 = vadd.f32 %v1314, %v1315
          %v1317 = vsel %vm1311, %v1305, 0.0
          %v1318 = vadd.f32 %v1316, %v1317
          %v1319 = vadd.f32 %v1310, %v1318
          %1320 = vst.msk [vmem:[#allocation5] sm:$0xff] %vm1311, %v1319
        $region88: #{tpu_custom_call.1} parent=47 // pred_fallthru
          _
        %p1321 = pnand %p534, %p1078
        %p1322 = pneg %p1321
        // Predicated region
        $region89: #{tpu_custom_call.1} parent=47 // pred_check
          _
        $region90: #{tpu_custom_call.1} parent=47 // pred_check_branch
          %1324 = sbr.rel (%p1321) target = $region92
        $region91: #{tpu_custom_call.1} parent=47 // pred_region
          %v1325 = vld [vmem:[%s482 + $0x4] sm:$0x1]
          %v1326 = vld [vmem:[#allocation5] sm:$0xff]
          %v1327 = vld [vmem:[#allocation14] sm:$0x1]
          %v1329 = vlaneseq
          %v1330 = vshrl.u32 %v1329, 7
          %v1331 = vsub.s32 0, %v1330
          %v1332 = vrot.slane %v1327, %v1331
          %v1334 = vadd.f32 %v1326, %v1332
          %v1335 = vld [vmem:[%s473] sm:$0xff]
          %v1336 = vlaneseq
          %v1337 = vshrl.u32 %v1336, 7
          %v1338 = vsub.s32 0, %v1337
          %v1339 = vrot.slane %v1325, %v1338
          %v1340 = vmul.f32 %v1339, %v1334
          %v1341 = vadd.f32 %v1335, %v1340
          %vm1342 = vcmask 261120
          %1343 = vst.msk [vmem:[%s532] sm:$0xff] %vm1342, %v1341
        $region92: #{tpu_custom_call.1} parent=47 // pred_fallthru
          _
        %s1344 = sand.u32 %s258, 1
        %s1345 = scalar_lea.sflag [#allocation8], %s1344
        %s1346 = sand.u32 %s258, 1
        %s1347 = smul.addr %s1346, 8
        %s1348 = scalar_lea.vmem [#allocation18], %s1347
        // Predicated region
        $region93: #{tpu_custom_call.1} parent=47 // pred_check
          %p1349 = pneg %p268
        $region94: #{tpu_custom_call.1} parent=47 // pred_check_branch
          %1351 = sbr.rel (%p1349) target = $region96
        $region95: #{tpu_custom_call.1} parent=47 // pred_region
          %s1353 = ssub.s32 128, 128
          %1354 = vsyncadd %s1345, %s1353
          %s1355 = smul.addr %s37, 2
          %s1356 = sadd.s32 %s38, %s1355
          %s1357 = smul.addr %s1356, 128
          %s1358 = scalar_lea.hbm %s7, %s1357
          %s1360 = sshll.u32 %s1348, 4
          %s1361 = int_to_ptr.vmem [resolvable:$true] %s1360
          %1363 = dma.vmem_to_hbm [thread:$0]  %s1361, 128, %s1358, %s1345
        $region96: #{tpu_custom_call.1} parent=47 // pred_fallthru
          _
      $region48: #{tpu_custom_call.1} parent=5 // pred_fallthru
        _
      %p1364 = scmp.le.s32.totalorder 2, %s26
      // Predicated region
      $region97: #{tpu_custom_call.1} parent=5 // pred_check
        %p1365 = pneg %p1364
      $region98: #{tpu_custom_call.1} parent=5 // pred_check_branch
        %1367 = sbr.rel (%p1365) target = $region100
      $region99: #{tpu_custom_call.1} parent=5 // pred_region
        %s1368 = ssub.s32 %s26, 2
        // Predicated region
        $region101: #{tpu_custom_call.1} parent=99 // pred_check
          %p1369 = pneg %p274
        $region102: #{tpu_custom_call.1} parent=99 // pred_check_branch
          %1371 = sbr.rel (%p1369) target = $region104
        $region103: #{tpu_custom_call.1} parent=99 // pred_region
          %s1372 = sand.u32 %s259, 1
          %s1373 = scalar_lea.sflag [#allocation8], %s1372
          %s1374 = sand.u32 %s259, 1
          %s1375 = smul.addr %s1374, 8
          %s1376 = scalar_lea.vmem [#allocation18], %s1375
          %1377 = dma.done %s1373, 128
        $region104: #{tpu_custom_call.1} parent=99 // pred_fallthru
          _
      $region100: #{tpu_custom_call.1} parent=5 // pred_fallthru
        _
    $region6: #{tpu_custom_call.1} parent=1 // loop_footer
      %s30 = sadd.s32 1, %s26
    $region7: #{tpu_custom_call.1} parent=1 // loop_footer_branch
      %25 = sbr.rel target = $region3
    $region8: #{tpu_custom_call.1} parent=1 // loop_exit
      _
    %1378 = vsyncpa [#allocation7], 1
    %s1379 = scalar_lea.sflag [#allocation7], 1
    %1380 = vsyncpa %s1379, 1
    %1381 = vsyncpa [#allocation10], 1
    %s1382 = scalar_lea.sflag [#allocation10], 1
    %1383 = vsyncpa %s1382, 1
    %1384 = vsyncpa [#allocation13], 1
    %1385 = vsyncpa [#allocation16], 1
    %s1386 = scalar_lea.sflag [#allocation16], 1
    %1387 = vsyncpa %s1386, 1
    %1388 = vsyncpa [#allocation8], 1
    %s1389 = scalar_lea.sflag [#allocation8], 1
    %1390 = vsyncpa %s1389, 1

</llo_original>
